<compile_context>
chip_gen: v7x
topology: tpu7x:2x2x1
jax: 0.10.0
libtpu: 0.0.40
codegen_flags: <defaults>
</compile_context>

<pallas_src>
import numpy as np
import jax
import jax.numpy as jnp
from jax import lax
from jax.experimental import pallas as pl
from jax.experimental.pallas import tpu as pltpu

# ---- problem constants (from the script) -----------------------------------
NUM = 30                 # trajectory samples
NVAR = 11                # number of basis coefficients
NEQ = 6                  # rows of A_eq
OUT_SIZE = 12            # linear2 output / b size (6 for x, 6 for y)
HID = 64                 # linear1 output width
RHO_EQ = 10.0
WEIGHT_SMOOTHNESS = 10.0
MAXITER = 300
INPUT_SIZE = 20 * 2 + 4  # total_size = 44 (as in the driver script)
PACK = 128               # lane-dense packed width for input and output
BATCH = 1024             # demo batch (grid of 2 blocks at TB=512)
TB = 512                 # batch tile per grid step


# ---- Pallas kernel ----------------------------------------------------------
def trajnet_kernel(xb_ref, w1_ref, b1_ref, w2p_ref, bk_ref, c_ref, out_ref):
    f32 = jnp.float32

    # Packed streamed input: cols [0:44]=x, [44:56]=b, rest zero.  bf16.
    xb = xb_ref[...]                                                  # (TB, 128)

    # linear1 -> ReLU  (bf16 operands, f32 accumulation on the MXU)
    h = jnp.maximum(
        jnp.dot(xb, w1_ref[...], preferred_element_type=f32) + b1_ref[...],
        0.0)                                                          # (TB, 64)

    # Folded linear2 + mask blend + 300-iteration dual ascent + P projection:
    #   out = h @ W2' + xb @ BK + c'     (all lane-dense, 128-wide)
    xb_f32 = xb.astype(f32)
    out_ref[...] = (jnp.dot(h, w2p_ref[...], preferred_element_type=f32)
                    + jnp.dot(xb_f32, bk_ref[...], preferred_element_type=f32)
                    + c_ref[...])


def trajnet_forward(x, b, kernel_params, *, tb=TB):
    """kernel_params = (W1p[128,64] bf16, b1[1,64] f32, W2p[64,128] f32,
                        BK[128,128] f32, cp[1,128] f32)."""
    w1p, b1, w2p, bk, cp = kernel_params
    bsz = x.shape[0]

    # Pack x and b into one lane-dense streamed operand (bf16).
    xb = jnp.zeros((bsz, PACK), jnp.float32)
    xb = xb.at[:, :INPUT_SIZE].set(x)
    xb = xb.at[:, INPUT_SIZE:INPUT_SIZE + OUT_SIZE].set(b)
    xb = xb.astype(jnp.bfloat16)

    # Pad batch to a multiple of the tile so the grid covers it exactly.
    grid_b = pl.cdiv(bsz, tb)
    padded = grid_b * tb
    if padded != bsz:
        xb = jnp.pad(xb, ((0, padded - bsz), (0, 0)))

    out = pl.pallas_call(
        trajnet_kernel,
        out_shape=jax.ShapeDtypeStruct((padded, PACK), jnp.float32),
        grid=(grid_b,),
        in_specs=[
            pl.BlockSpec((tb, PACK), lambda i: (i, 0)),       # streamed input
            pl.BlockSpec((PACK, HID), lambda i: (0, 0)),      # W1p (resident)
            pl.BlockSpec((1, HID), lambda i: (0, 0)),         # b1  (resident)
            pl.BlockSpec((HID, PACK), lambda i: (0, 0)),      # W2' (resident)
            pl.BlockSpec((PACK, PACK), lambda i: (0, 0)),     # BK  (resident)
            pl.BlockSpec((1, PACK), lambda i: (0, 0)),        # c'  (resident)
        ],
        out_specs=pl.BlockSpec((tb, PACK), lambda i: (i, 0)),
        compiler_params=pltpu.CompilerParams(
            dimension_semantics=("parallel",)),
    )(xb, w1p, b1, w2p, bk, cp)

    return out[:bsz, :2 * NUM]


# ---- pure-JAX reference: the original 300-iteration dual-ascent loop --------
def trajnet_reference(x, b, ref_params):
    W1, b1, W2, b2, mask, A, AT, MT, PT = ref_params
    h = jnp.maximum(x @ W1 + b1, 0.0)
    b_pred = h @ W2 + b2
    b_gen = mask * b + (1.0 - mask) * b_pred
    bx, by = b_gen[:, :NEQ], b_gen[:, NEQ:OUT_SIZE]
    bsz = x.shape[0]
    lam0 = jnp.zeros((bsz, NVAR), jnp.float32)

    def step(_, carry):
        lx, ly, _, _ = carry
        lcx = -lx - RHO_EQ * (bx @ A)
        lcy = -ly - RHO_EQ * (by @ A)
        sx, sy = lcx @ MT, lcy @ MT
        lx = lx - RHO_EQ * ((sx @ AT - bx) @ A)
        ly = ly - RHO_EQ * ((sy @ AT - by) @ A)
        return lx, ly, sx, sy

    _, _, sx, sy = lax.fori_loop(0, MAXITER, step, (lam0, lam0, lam0, lam0))
    return jnp.concatenate([sx @ PT, sy @ PT], axis=1)


# ---- deterministic parameter construction -----------------------------------
def build_params(key):
    ks = jax.random.split(key, 7)
    # synthetic basis matrices (P, Pdot, Pddot are not given; random stand-ins)
    P = jax.random.normal(ks[0], (NUM, NVAR), jnp.float32)
    Pdot = jax.random.normal(ks[1], (NUM, NVAR), jnp.float32)
    Pddot = jax.random.normal(ks[2], (NUM, NVAR), jnp.float32)
    A_eq = jnp.stack([P[0], Pdot[0], Pddot[0], P[-1], Pdot[-1], Pddot[-1]], axis=0)

    # ---- host-side float64 fold of the OPTNode loop ----
    P64 = np.asarray(P, np.float64)
    Pddot64 = np.asarray(Pddot, np.float64)
    A64 = np.asarray(A_eq, np.float64)

    cost = (WEIGHT_SMOOTHNESS * Pddot64.T @ Pddot64
            + RHO_EQ * A64.T @ A64)                       # (11, 11) constant
    MinvT = np.linalg.inv(-cost).T                        # inv(-cost)^T
    ATA = A64.T @ A64

    # lamda_{k+1} = (lamda_k + c) @ G  with  c = rho * (b_half @ A_eq)
    G = np.eye(NVAR) + RHO_EQ * (MinvT @ ATA)             # (11, 11)

    # S = I + G + ... + G^(MAXITER-1)  (exactly MAXITER terms; f64 accumulation)
    S = np.eye(NVAR)
    Gp = np.eye(NVAR)
    for _ in range(MAXITER - 1):
        Gp = Gp @ G
        S = S + Gp

    # sol = b_half @ K ;  traj = sol @ P^T = b_half @ (K @ P^T)
    K = -RHO_EQ * (A64 @ S @ MinvT)                       # (6, 11)
    KP = K @ P64.T                                        # (6, 30)
    KP2 = np.zeros((OUT_SIZE, PACK), np.float64)          # lane-dense padded
    KP2[:NEQ, :NUM] = KP
    KP2[NEQ:, NUM:2 * NUM] = KP
    # Guards per review: the geometric sum can blow up if rho(G) >= 1.
    assert np.all(np.isfinite(KP2)), "folded ADMM constant is non-finite"
    assert np.abs(KP2).max() < 1e30, "folded ADMM constant exceeds f32 range"

    # ---- MLP parameters ----
    W1 = 0.1 * jax.random.normal(ks[3], (INPUT_SIZE, HID), jnp.float32)
    b1 = 0.1 * jax.random.normal(ks[4], (1, HID), jnp.float32)
    W2 = 0.1 * jax.random.normal(ks[5], (HID, OUT_SIZE), jnp.float32)
    b2 = 0.1 * jax.random.normal(ks[6], (1, OUT_SIZE), jnp.float32)
    mask_np = np.array([[1., 1., 1., 0., 1., 1., 1., 1., 1., 0., 1., 1.]],
                       np.float64)
    omm_np = 1.0 - mask_np

    # ---- host-side f64 fold of mask/blend into the constants ----
    W2_64 = np.asarray(W2, np.float64)
    b2_64 = np.asarray(b2, np.float64)
    W2p = W2_64 @ (omm_np.T * KP2)                        # (64, 128)
    cp = (b2_64 * omm_np) @ KP2                           # (1, 128)
    KP2_b = mask_np.T * KP2                               # (12, 128)

    # Pack W1 and KP2_b into the 128-wide packed-input layout.
    W1p = np.zeros((PACK, HID), np.float32)
    W1p[:INPUT_SIZE, :] = np.asarray(W1)
    BK = np.zeros((PACK, PACK), np.float64)
    BK[INPUT_SIZE:INPUT_SIZE + OUT_SIZE, :] = KP2_b

    kernel_params = (
        jnp.asarray(W1p, jnp.bfloat16),        # bf16 matmul operand
        jnp.asarray(b1, jnp.float32),
        jnp.asarray(W2p, jnp.float32),         # KP2-derived: keep f32
        jnp.asarray(BK, jnp.float32),          # KP2-derived: keep f32
        jnp.asarray(cp, jnp.float32),          # KP2-derived: keep f32
    )
    ref_params = (W1, b1, W2, b2, jnp.asarray(mask_np, jnp.float32),
                  A_eq, A_eq.T, jnp.asarray(MinvT, jnp.float32), P.T)
    return kernel_params, ref_params


if __name__ == "__main__":
    key = jax.random.PRNGKey(0)
    k_par, k_x, k_b = jax.random.split(key, 3)

    kernel_params, ref_params = build_params(k_par)
    x_inp = jax.random.normal(k_x, (BATCH, INPUT_SIZE), jnp.float32)
    b_inp = jax.random.normal(k_b, (BATCH, OUT_SIZE), jnp.float32)

    fwd = jax.jit(lambda x, b: trajnet_forward(x, b, kernel_params))
    out = jax.block_until_ready(fwd(x_inp, b_inp))
    assert out.shape == (BATCH, 2 * NUM)

    ref = jax.block_until_ready(
        jax.jit(trajnet_reference)(x_inp, b_inp, ref_params))
    np.testing.assert_allclose(np.asarray(out), np.asarray(ref),
                               rtol=5e-2, atol=5e-2)

    print("KERNEL_OK")
</pallas_src>

<mosaic_0001>
module attributes {stable_mosaic.version = 11 : i64} {
  func.func @trajnet_kernel(%arg0: i32, %arg1: memref<512x128xbf16, #tpu.memory_space<vmem>>, %arg2: memref<128x64xbf16, #tpu.memory_space<vmem>>, %arg3: memref<1x64xf32, #tpu.memory_space<vmem>>, %arg4: memref<64x128xf32, #tpu.memory_space<vmem>>, %arg5: memref<128x128xf32, #tpu.memory_space<vmem>>, %arg6: memref<1x128xf32, #tpu.memory_space<vmem>>, %arg7: memref<512x128xf32, #tpu.memory_space<vmem>>) attributes {dimension_semantics = [#tpu.dimension_semantics<parallel>], iteration_bounds = array<i64: 2>, scalar_prefetch = 0 : i64, scratch_operands = 0 : i64, tpu.core_type = #tpu.core_type<tc>, window_params = [{transform_indices = @transform_0, window_bounds = array<i64: 512, 128>}, {pipeline_mode = #tpu.pipeline_mode<synchronous>, transform_indices = @transform_1, window_bounds = array<i64: 128, 64>}, {pipeline_mode = #tpu.pipeline_mode<synchronous>, transform_indices = @transform_2, window_bounds = array<i64: 1, 64>}, {pipeline_mode = #tpu.pipeline_mode<synchronous>, transform_indices = @transform_3, window_bounds = array<i64: 64, 128>}, {pipeline_mode = #tpu.pipeline_mode<synchronous>, transform_indices = @transform_4, window_bounds = array<i64: 128, 128>}, {pipeline_mode = #tpu.pipeline_mode<synchronous>, transform_indices = @transform_5, window_bounds = array<i64: 1, 128>}, {transform_indices = @transform_6, window_bounds = array<i64: 512, 128>}]} {
    %c0 = arith.constant 0 : index
    %c0_0 = arith.constant 0 : index
    %0 = vector.load %arg1[%c0, %c0_0] : memref<512x128xbf16, #tpu.memory_space<vmem>>, vector<512x128xbf16>
    %c0_1 = arith.constant 0 : index
    %c0_2 = arith.constant 0 : index
    %1 = vector.load %arg2[%c0_1, %c0_2] : memref<128x64xbf16, #tpu.memory_space<vmem>>, vector<128x64xbf16>
    %cst = arith.constant dense<0.000000e+00> : vector<512x64xf32>
    %2 = tpu.matmul %0, %1, %cst {dimension_numbers = #tpu.dot_dimension_numbers<[1], [0], [0], [1], [0, 0, 1, 1], [], []>} : vector<512x128xbf16>, vector<128x64xbf16>, vector<512x64xf32> -> vector<512x64xf32>
    %c0_3 = arith.constant 0 : index
    %c0_4 = arith.constant 0 : index
    %3 = vector.load %arg3[%c0_3, %c0_4] : memref<1x64xf32, #tpu.memory_space<vmem>>, vector<1x64xf32>
    %4 = vector.broadcast %3 : vector<1x64xf32> to vector<512x64xf32>
    %5 = arith.addf %2, %4 : vector<512x64xf32>
    %cst_5 = arith.constant 0.000000e+00 : f32
    %6 = vector.broadcast %cst_5 : f32 to vector<512x64xf32>
    %7 = arith.maximumf %5, %6 : vector<512x64xf32>
    %8 = arith.extf %0 : vector<512x128xbf16> to vector<512x128xf32>
    %c0_6 = arith.constant 0 : index
    %c0_7 = arith.constant 0 : index
    %9 = vector.load %arg4[%c0_6, %c0_7] : memref<64x128xf32, #tpu.memory_space<vmem>>, vector<64x128xf32>
    %cst_8 = arith.constant dense<0.000000e+00> : vector<512x128xf32>
    %10 = tpu.matmul %7, %9, %cst_8 {dimension_numbers = #tpu.dot_dimension_numbers<[1], [0], [0], [1], [0, 0, 1, 1], [], []>} : vector<512x64xf32>, vector<64x128xf32>, vector<512x128xf32> -> vector<512x128xf32>
    %c0_9 = arith.constant 0 : index
    %c0_10 = arith.constant 0 : index
    %11 = vector.load %arg5[%c0_9, %c0_10] : memref<128x128xf32, #tpu.memory_space<vmem>>, vector<128x128xf32>
    %cst_11 = arith.constant dense<0.000000e+00> : vector<512x128xf32>
    %12 = tpu.matmul %8, %11, %cst_11 {dimension_numbers = #tpu.dot_dimension_numbers<[1], [0], [0], [1], [0, 0, 1, 1], [], []>} : vector<512x128xf32>, vector<128x128xf32>, vector<512x128xf32> -> vector<512x128xf32>
    %13 = arith.addf %10, %12 : vector<512x128xf32>
    %c0_12 = arith.constant 0 : index
    %c0_13 = arith.constant 0 : index
    %14 = vector.load %arg6[%c0_12, %c0_13] : memref<1x128xf32, #tpu.memory_space<vmem>>, vector<1x128xf32>
    %15 = vector.broadcast %14 : vector<1x128xf32> to vector<512x128xf32>
    %16 = arith.addf %13, %15 : vector<512x128xf32>
    %c0_14 = arith.constant 0 : index
    %c0_15 = arith.constant 0 : index
    %17 = vector.load %arg7[%c0_14, %c0_15] : memref<512x128xf32, #tpu.memory_space<vmem>>, vector<512x128xf32>
    tpu.vector_store %arg7[%c0_14, %c0_15], %16 {strides = array<i32>} : memref<512x128xf32, #tpu.memory_space<vmem>>, vector<512x128xf32>,
    return
  }
  func.func @transform_0(%arg0: i32) -> (i32, i32) {
    %c0_i32 = arith.constant 0 : i32
    %c0_i32_0 = arith.constant 0 : i32
    return %arg0, %c0_i32 : i32, i32
  }
  func.func @transform_1(%arg0: i32) -> (i32, i32) {
    %c0_i32 = arith.constant 0 : i32
    %c0_i32_0 = arith.constant 0 : i32
    %c0_i32_1 = arith.constant 0 : i32
    return %c0_i32, %c0_i32_0 : i32, i32
  }
  func.func @transform_2(%arg0: i32) -> (i32, i32) {
    %c0_i32 = arith.constant 0 : i32
    %c0_i32_0 = arith.constant 0 : i32
    %c0_i32_1 = arith.constant 0 : i32
    return %c0_i32, %c0_i32_0 : i32, i32
  }
  func.func @transform_3(%arg0: i32) -> (i32, i32) {
    %c0_i32 = arith.constant 0 : i32
    %c0_i32_0 = arith.constant 0 : i32
    %c0_i32_1 = arith.constant 0 : i32
    return %c0_i32, %c0_i32_0 : i32, i32
  }
  func.func @transform_4(%arg0: i32) -> (i32, i32) {
    %c0_i32 = arith.constant 0 : i32
    %c0_i32_0 = arith.constant 0 : i32
    %c0_i32_1 = arith.constant 0 : i32
    return %c0_i32, %c0_i32_0 : i32, i32
  }
  func.func @transform_5(%arg0: i32) -> (i32, i32) {
    %c0_i32 = arith.constant 0 : i32
    %c0_i32_0 = arith.constant 0 : i32
    %c0_i32_1 = arith.constant 0 : i32
    return %c0_i32, %c0_i32_0 : i32, i32
  }
  func.func @transform_6(%arg0: i32) -> (i32, i32) {
    %c0_i32 = arith.constant 0 : i32
    %c0_i32_0 = arith.constant 0 : i32
    return %arg0, %c0_i32 : i32, i32
  }
}

</mosaic_0001>

<llo_original>
// kernel: _lambda_.1
$region0: #{_lambda_.1}
  #allocation0 [shape = 'u32[]', space=smem, size = 0x4, offset = 0x4, fixed_abs, tag = 'smem constant byte address 0x4 - core index']
  #allocation1 [shape = 'u32[144,128]{1,0:T(1,128)}', space=vmem, size = 0x12000, scoped, tag = 'internal scratch']
  %s0 = inlined_call_operand.vmem [shape: bf16[1024,128], index: 0, kind: input, shape index: {}]
  %s1 = inlined_call_operand.vmem [shape: bf16[128,64], index: 1, kind: input, shape index: {}]
  %s2 = inlined_call_operand.vmem [shape: f32[1,64], index: 2, kind: input, shape index: {}]
  %s3 = inlined_call_operand.vmem [shape: f32[64,128], index: 3, kind: input, shape index: {}]
  %s4 = inlined_call_operand.vmem [shape: f32[128,128], index: 4, kind: input, shape index: {}]
  %s5 = inlined_call_operand.vmem [shape: f32[1,128], index: 5, kind: input, shape index: {}]
  %s6 = inlined_call_operand.vmem [shape: f32[1024,128], index: 6, kind: output, shape index: {}]
  %s7 = sld [smem:[#allocation0]]
  $region57: #{_lambda_.1} parent=0
    _
  %s9 = ssub.s32 1, %s7
  %s10 = scalar_select 0, %s9, %s7
  loop: start=0, step=1, limit=4
  $region2: #{_lambda_.1} parent=0 // loop_pre_header
    _
  $region3: #{_lambda_.1} parent=0 // loop_header
    %s12 = sphi 0, %s16
    %p13 = scmp.ge.s32.totalorder %s12, 4
    %s22 = sphi 0, %s24
    %s25 = sphi 0, %s22
    %s26 = sphi 0, %s25
    %s42 = sphi 0, %s26
    %s46 = sphi 0, %s46
    %s48 = sphi 0, %s46
    %s49 = sphi 0, %s48
    %s63 = sphi 0, %s49
    %s67 = sphi 0, %s67
    %s69 = sphi 0, %s67
    %s70 = sphi 0, %s69
    %s84 = sphi 0, %s70
    %s88 = sphi 0, %s88
    %s90 = sphi 0, %s88
    %s91 = sphi 0, %s90
    %s105 = sphi 0, %s91
    %s109 = sphi 0, %s109
    %s111 = sphi 0, %s109
    %s112 = sphi 0, %s111
    %s126 = sphi 0, %s112
    %s130 = sphi 0, %s130
    %s132 = sphi 0, %s130
    %s133 = sphi 0, %s132
    %s147 = sphi 0, %s133
    %s153 = sphi 0, %s155
    %s156 = sphi 0, %s153
    %s157 = sphi 0, %s156
    %s173 = sphi 0, %s157
  $region4: #{_lambda_.1} parent=0 // loop_header_branch
    %15 = sbr.rel (%p13) target = $region8
  $region5: #{_lambda_.1} parent=0 // loop_body
    %s17 = ssub.s32 %s12, 1
    %s18 = ssub.s32 %s12, 2
    %s19 = sadd.s32 %s12, 1
    %s20 = ssub.s32 %s12, %s19
    %p21 = scmp.eq.s32.totalorder %s20, 0
    %s23 = sadd.s32 %s22, 1
    %s24 = scalar_select %p21, %s22, %s23
    %p27 = pneg %p21
    %p28 = scmp.eq.s32.totalorder %s12, 1
    %p29 = por %p27, %p28
    %p30 = scmp.ne.s32.totalorder %s22, %s25
    %p31 = scmp.eq.s32.totalorder %s12, 0
    %p32 = por %p30, %p31
    %p33 = scmp.ne.s32.totalorder %s22, %s25
    %p34 = scmp.eq.s32.totalorder %s17, 1
    %p35 = por %p33, %p34
    %p36 = scmp.ne.s32.totalorder %s25, %s26
    %p37 = scmp.eq.s32.totalorder %s17, 0
    %p38 = por %p36, %p37
    %p39 = scmp.ne.s32.totalorder %s25, %s26
    %p40 = scmp.eq.s32.totalorder %s18, 1
    %p41 = por %p39, %p40
    %p43 = scmp.ne.s32.totalorder %s26, %s42
    %p44 = scmp.eq.s32.totalorder %s18, 0
    %p45 = por %p43, %p44
    %s47 = sadd.s32 %s46, 1
    %p50 = scmp.eq.s32.totalorder %s12, 1
    %p51 = scmp.ne.s32.totalorder %s46, %s48
    %p52 = scmp.eq.s32.totalorder %s12, 0
    %p53 = por %p51, %p52
    %p54 = scmp.ne.s32.totalorder %s46, %s48
    %p55 = scmp.eq.s32.totalorder %s17, 1
    %p56 = por %p54, %p55
    %p57 = scmp.ne.s32.totalorder %s48, %s49
    %p58 = scmp.eq.s32.totalorder %s17, 0
    %p59 = por %p57, %p58
    %p60 = scmp.ne.s32.totalorder %s48, %s49
    %p61 = scmp.eq.s32.totalorder %s18, 1
    %p62 = por %p60, %p61
    %p64 = scmp.ne.s32.totalorder %s49, %s63
    %p65 = scmp.eq.s32.totalorder %s18, 0
    %p66 = por %p64, %p65
    %s68 = sadd.s32 %s67, 1
    %p71 = scmp.eq.s32.totalorder %s12, 1
    %p72 = scmp.ne.s32.totalorder %s67, %s69
    %p73 = scmp.eq.s32.totalorder %s12, 0
    %p74 = por %p72, %p73
    %p75 = scmp.ne.s32.totalorder %s67, %s69
    %p76 = scmp.eq.s32.totalorder %s17, 1
    %p77 = por %p75, %p76
    %p78 = scmp.ne.s32.totalorder %s69, %s70
    %p79 = scmp.eq.s32.totalorder %s17, 0
    %p80 = por %p78, %p79
    %p81 = scmp.ne.s32.totalorder %s69, %s70
    %p82 = scmp.eq.s32.totalorder %s18, 1
    %p83 = por %p81, %p82
    %p85 = scmp.ne.s32.totalorder %s70, %s84
    %p86 = scmp.eq.s32.totalorder %s18, 0
    %p87 = por %p85, %p86
    %s89 = sadd.s32 %s88, 1
    %p92 = scmp.eq.s32.totalorder %s12, 1
    %p93 = scmp.ne.s32.totalorder %s88, %s90
    %p94 = scmp.eq.s32.totalorder %s12, 0
    %p95 = por %p93, %p94
    %p96 = scmp.ne.s32.totalorder %s88, %s90
    %p97 = scmp.eq.s32.totalorder %s17, 1
    %p98 = por %p96, %p97
    %p99 = scmp.ne.s32.totalorder %s90, %s91
    %p100 = scmp.eq.s32.totalorder %s17, 0
    %p101 = por %p99, %p100
    %p102 = scmp.ne.s32.totalorder %s90, %s91
    %p103 = scmp.eq.s32.totalorder %s18, 1
    %p104 = por %p102, %p103
    %p106 = scmp.ne.s32.totalorder %s91, %s105
    %p107 = scmp.eq.s32.totalorder %s18, 0
    %p108 = por %p106, %p107
    %s110 = sadd.s32 %s109, 1
    %p113 = scmp.eq.s32.totalorder %s12, 1
    %p114 = scmp.ne.s32.totalorder %s109, %s111
    %p115 = scmp.eq.s32.totalorder %s12, 0
    %p116 = por %p114, %p115
    %p117 = scmp.ne.s32.totalorder %s109, %s111
    %p118 = scmp.eq.s32.totalorder %s17, 1
    %p119 = por %p117, %p118
    %p120 = scmp.ne.s32.totalorder %s111, %s112
    %p121 = scmp.eq.s32.totalorder %s17, 0
    %p122 = por %p120, %p121
    %p123 = scmp.ne.s32.totalorder %s111, %s112
    %p124 = scmp.eq.s32.totalorder %s18, 1
    %p125 = por %p123, %p124
    %p127 = scmp.ne.s32.totalorder %s112, %s126
    %p128 = scmp.eq.s32.totalorder %s18, 0
    %p129 = por %p127, %p128
    %s131 = sadd.s32 %s130, 1
    %p134 = scmp.eq.s32.totalorder %s12, 1
    %p135 = scmp.ne.s32.totalorder %s130, %s132
    %p136 = scmp.eq.s32.totalorder %s12, 0
    %p137 = por %p135, %p136
    %p138 = scmp.ne.s32.totalorder %s130, %s132
    %p139 = scmp.eq.s32.totalorder %s17, 1
    %p140 = por %p138, %p139
    %p141 = scmp.ne.s32.totalorder %s132, %s133
    %p142 = scmp.eq.s32.totalorder %s17, 0
    %p143 = por %p141, %p142
    %p144 = scmp.ne.s32.totalorder %s132, %s133
    %p145 = scmp.eq.s32.totalorder %s18, 1
    %p146 = por %p144, %p145
    %p148 = scmp.ne.s32.totalorder %s133, %s147
    %p149 = scmp.eq.s32.totalorder %s18, 0
    %p150 = por %p148, %p149
    %s151 = ssub.s32 %s12, %s19
    %p152 = scmp.eq.s32.totalorder %s151, 0
    %s154 = sadd.s32 %s153, 1
    %s155 = scalar_select %p152, %s153, %s154
    %p158 = pneg %p152
    %p159 = scmp.eq.s32.totalorder %s12, 1
    %p160 = por %p158, %p159
    %p161 = scmp.ne.s32.totalorder %s153, %s156
    %p162 = scmp.eq.s32.totalorder %s12, 0
    %p163 = por %p161, %p162
    %p164 = scmp.ne.s32.totalorder %s153, %s156
    %p165 = scmp.eq.s32.totalorder %s17, 1
    %p166 = por %p164, %p165
    %p167 = scmp.ne.s32.totalorder %s156, %s157
    %p168 = scmp.eq.s32.totalorder %s17, 0
    %p169 = por %p167, %p168
    %p170 = scmp.ne.s32.totalorder %s156, %s157
    %p171 = scmp.eq.s32.totalorder %s18, 1
    %p172 = por %p170, %p171
    %p174 = scmp.ne.s32.totalorder %s157, %s173
    %p175 = scmp.eq.s32.totalorder %s18, 0
    %p176 = por %p174, %p175
    %p177 = scmp.le.s32.totalorder 1, %s12
    %p178 = scmp.lt.s32.totalorder %s12, 3
    %p179 = pnand %p177, %p178
    %p180 = pneg %p179
    // Predicated region
    $region9: #{_lambda_.1} parent=5 // pred_check
      _
    $region10: #{_lambda_.1} parent=5 // pred_check_branch
      %182 = sbr.rel (%p179) target = $region12
    $region11: #{_lambda_.1} parent=5 // pred_region
      %s183 = ssub.s32 %s12, 1
      // Predicated region
      $region13: #{_lambda_.1} parent=11 // pred_check
        %p184 = pneg %p59
      $region14: #{_lambda_.1} parent=11 // pred_check_branch
        %186 = sbr.rel (%p184) target = $region16
      $region15: #{_lambda_.1} parent=11 // pred_region
        _
      $region16: #{_lambda_.1} parent=11 // pred_fallthru
        _
      // Predicated region
      $region17: #{_lambda_.1} parent=11 // pred_check
        %p187 = pneg %p80
      $region18: #{_lambda_.1} parent=11 // pred_check_branch
        %189 = sbr.rel (%p187) target = $region20
      $region19: #{_lambda_.1} parent=11 // pred_region
        _
      $region20: #{_lambda_.1} parent=11 // pred_fallthru
        _
      // Predicated region
      $region21: #{_lambda_.1} parent=11 // pred_check
        %p190 = pneg %p101
      $region22: #{_lambda_.1} parent=11 // pred_check_branch
        %192 = sbr.rel (%p190) target = $region24
      $region23: #{_lambda_.1} parent=11 // pred_region
        _
      $region24: #{_lambda_.1} parent=11 // pred_fallthru
        _
      // Predicated region
      $region25: #{_lambda_.1} parent=11 // pred_check
        %p193 = pneg %p122
      $region26: #{_lambda_.1} parent=11 // pred_check_branch
        %195 = sbr.rel (%p193) target = $region28
      $region27: #{_lambda_.1} parent=11 // pred_region
        _
      $region28: #{_lambda_.1} parent=11 // pred_fallthru
        _
      // Predicated region
      $region29: #{_lambda_.1} parent=11 // pred_check
        %p196 = pneg %p143
      $region30: #{_lambda_.1} parent=11 // pred_check_branch
        %198 = sbr.rel (%p196) target = $region32
      $region31: #{_lambda_.1} parent=11 // pred_region
        _
      $region32: #{_lambda_.1} parent=11 // pred_fallthru
        _
    $region12: #{_lambda_.1} parent=5 // pred_fallthru
      _
    %p199 = scmp.lt.s32.totalorder %s12, 2
    // Predicated region
    $region33: #{_lambda_.1} parent=5 // pred_check
      %p200 = pneg %p199
    $region34: #{_lambda_.1} parent=5 // pred_check_branch
      %202 = sbr.rel (%p200) target = $region36
    $region35: #{_lambda_.1} parent=5 // pred_region
      // Predicated region
      $region37: #{_lambda_.1} parent=35 // pred_check
        %p203 = pneg %p32
      $region38: #{_lambda_.1} parent=35 // pred_check_branch
        %205 = sbr.rel (%p203) target = $region40
      $region39: #{_lambda_.1} parent=35 // pred_region
        %s206 = smul.u32 64, %s12
        %p207 = scmp.lt.s32.totalorder %s206, 127
        %s208 = scalar_select %p207, %s206, 127
        %s209 = smul.addr %s208, 4
        %s210 = scalar_lea.vmem %s0, %s209
        %s211 = smul.u32 64, %s12
      $region40: #{_lambda_.1} parent=35 // pred_fallthru
        _
    $region36: #{_lambda_.1} parent=5 // pred_fallthru
      _
    %p212 = scmp.le.s32.totalorder 1, %s12
    %p213 = scmp.lt.s32.totalorder %s12, 3
    %p214 = pnand %p212, %p213
    %p215 = pneg %p214
    // Predicated region
    $region41: #{_lambda_.1} parent=5 // pred_check
      _
    $region42: #{_lambda_.1} parent=5 // pred_check_branch
      %217 = sbr.rel (%p214) target = $region44
    $region43: #{_lambda_.1} parent=5 // pred_region
      %s218 = ssub.s32 %s12, 1
      %s219 = smul.u32 64, %s17
      %p220 = scmp.lt.s32.totalorder %s219, 127
      %s221 = scalar_select %p220, %s219, 127
      %s222 = smul.addr %s221, 4
      %s223 = scalar_lea.vmem %s0, %s222
      %p224 = pneg %p38
      %p225 = pneg %p35
      %p226 = pneg %p59
      %p227 = pneg %p56
      %p228 = pneg %p80
      %p229 = pneg %p77
      %p230 = pneg %p101
      %p231 = pneg %p98
      %p232 = pneg %p122
      %p233 = pneg %p119
      %p234 = pneg %p143
      %p235 = pneg %p140
      %p236 = pneg %p169
      %p237 = pneg %p166
      %s238 = smul.u32 64, %s17
      %p239 = scmp.lt.s32.totalorder %s238, 127
      %s240 = scalar_select %p239, %s238, 127
      %s241 = smul.addr %s240, 8
      %s242 = scalar_lea.vmem %s6, %s241
      %s243 = smul.u32 64, %s17
      %p244 = scmp.lt.s32.totalorder %s243, 127
      %s245 = scalar_select %p244, %s243, 127
      %s246 = smul.addr %s245, 4
      %s247 = scalar_lea.vmem %s0, %s246
      %s248 = smul.u32 64, %s17
      %s249 = smul.u32 64, %s17
      %p250 = scmp.lt.s32.totalorder %s249, 127
      %s251 = scalar_select %p250, %s249, 127
      %s252 = smul.addr %s251, 8
      %s253 = scalar_lea.vmem %s6, %s252
      %s254 = smul.u32 64, %s17
      %v256 = vld [vmem:[%s247] sm:$0xf]
      %v257 = vld [vmem:[%s247 + $0x4] sm:$0xf]
      %v258 = vld [vmem:[%s247 + $0x8] sm:$0xf]
      %v259 = vld [vmem:[%s247 + $0xc] sm:$0xf]
      %v260 = vld [vmem:[%s247 + $0x10] sm:$0xf]
      %v261 = vld [vmem:[%s247 + $0x14] sm:$0xf]
      %v262 = vld [vmem:[%s247 + $0x18] sm:$0xf]
      %v263 = vld [vmem:[%s247 + $0x1c] sm:$0xf]
      %v264 = vld [vmem:[%s247 + $0x20] sm:$0xf]
      %v265 = vld [vmem:[%s247 + $0x24] sm:$0xf]
      %v266 = vld [vmem:[%s247 + $0x28] sm:$0xf]
      %v267 = vld [vmem:[%s247 + $0x2c] sm:$0xf]
      %v268 = vld [vmem:[%s247 + $0x30] sm:$0xf]
      %v269 = vld [vmem:[%s247 + $0x34] sm:$0xf]
      %v270 = vld [vmem:[%s247 + $0x38] sm:$0xf]
      %v271 = vld [vmem:[%s247 + $0x3c] sm:$0xf]
      %v272 = vld [vmem:[%s247 + $0x40] sm:$0xf]
      %v273 = vld [vmem:[%s247 + $0x44] sm:$0xf]
      %v274 = vld [vmem:[%s247 + $0x48] sm:$0xf]
      %v275 = vld [vmem:[%s247 + $0x4c] sm:$0xf]
      %v276 = vld [vmem:[%s247 + $0x50] sm:$0xf]
      %v277 = vld [vmem:[%s247 + $0x54] sm:$0xf]
      %v278 = vld [vmem:[%s247 + $0x58] sm:$0xf]
      %v279 = vld [vmem:[%s247 + $0x5c] sm:$0xf]
      %v280 = vld [vmem:[%s247 + $0x60] sm:$0xf]
      %v281 = vld [vmem:[%s247 + $0x64] sm:$0xf]
      %v282 = vld [vmem:[%s247 + $0x68] sm:$0xf]
      %v283 = vld [vmem:[%s247 + $0x6c] sm:$0xf]
      %v284 = vld [vmem:[%s247 + $0x70] sm:$0xf]
      %v285 = vld [vmem:[%s247 + $0x74] sm:$0xf]
      %v286 = vld [vmem:[%s247 + $0x78] sm:$0xf]
      %v287 = vld [vmem:[%s247 + $0x7c] sm:$0xf]
      %v288 = vld [vmem:[%s247 + $0x80] sm:$0xf]
      %v289 = vld [vmem:[%s247 + $0x84] sm:$0xf]
      %v290 = vld [vmem:[%s247 + $0x88] sm:$0xf]
      %v291 = vld [vmem:[%s247 + $0x8c] sm:$0xf]
      %v292 = vld [vmem:[%s247 + $0x90] sm:$0xf]
      %v293 = vld [vmem:[%s247 + $0x94] sm:$0xf]
      %v294 = vld [vmem:[%s247 + $0x98] sm:$0xf]
      %v295 = vld [vmem:[%s247 + $0x9c] sm:$0xf]
      %v296 = vld [vmem:[%s247 + $0xa0] sm:$0xf]
      %v297 = vld [vmem:[%s247 + $0xa4] sm:$0xf]
      %v298 = vld [vmem:[%s247 + $0xa8] sm:$0xf]
      %v299 = vld [vmem:[%s247 + $0xac] sm:$0xf]
      %v300 = vld [vmem:[%s247 + $0xb0] sm:$0xf]
      %v301 = vld [vmem:[%s247 + $0xb4] sm:$0xf]
      %v302 = vld [vmem:[%s247 + $0xb8] sm:$0xf]
      %v303 = vld [vmem:[%s247 + $0xbc] sm:$0xf]
      %v304 = vld [vmem:[%s247 + $0xc0] sm:$0xf]
      %v305 = vld [vmem:[%s247 + $0xc4] sm:$0xf]
      %v306 = vld [vmem:[%s247 + $0xc8] sm:$0xf]
      %v307 = vld [vmem:[%s247 + $0xcc] sm:$0xf]
      %v308 = vld [vmem:[%s247 + $0xd0] sm:$0xf]
      %v309 = vld [vmem:[%s247 + $0xd4] sm:$0xf]
      %v310 = vld [vmem:[%s247 + $0xd8] sm:$0xf]
      %v311 = vld [vmem:[%s247 + $0xdc] sm:$0xf]
      %v312 = vld [vmem:[%s247 + $0xe0] sm:$0xf]
      %v313 = vld [vmem:[%s247 + $0xe4] sm:$0xf]
      %v314 = vld [vmem:[%s247 + $0xe8] sm:$0xf]
      %v315 = vld [vmem:[%s247 + $0xec] sm:$0xf]
      %v316 = vld [vmem:[%s247 + $0xf0] sm:$0xf]
      %v317 = vld [vmem:[%s247 + $0xf4] sm:$0xf]
      %v318 = vld [vmem:[%s247 + $0xf8] sm:$0xf]
      %v319 = vld [vmem:[%s247 + $0xfc] sm:$0xf]
      %v320 = vld [vmem:[%s1] sm:$0xf]
      %v321 = vld [vmem:[%s1 + $0x4] sm:$0xf]
      %v322 = vld [vmem:[%s1 + $0x8] sm:$0xf]
      %v323 = vld [vmem:[%s1 + $0xc] sm:$0xf]
      %v324 = vld [vmem:[%s1 + $0x10] sm:$0xf]
      %v325 = vld [vmem:[%s1 + $0x14] sm:$0xf]
      %v326 = vld [vmem:[%s1 + $0x18] sm:$0xf]
      %v327 = vld [vmem:[%s1 + $0x1c] sm:$0xf]
      %v328 = vld [vmem:[%s1 + $0x20] sm:$0xf]
      %v329 = vld [vmem:[%s1 + $0x24] sm:$0xf]
      %v330 = vld [vmem:[%s1 + $0x28] sm:$0xf]
      %v331 = vld [vmem:[%s1 + $0x2c] sm:$0xf]
      %v332 = vld [vmem:[%s1 + $0x30] sm:$0xf]
      %v333 = vld [vmem:[%s1 + $0x34] sm:$0xf]
      %v334 = vld [vmem:[%s1 + $0x38] sm:$0xf]
      %v335 = vld [vmem:[%s1 + $0x3c] sm:$0xf]
      %v336 = vld [vmem:[%s2] sm:$0x1]
      %v338 = vlaneseq
      %v339 = vshrl.u32 %v338, 7
      %v340 = vsub.s32 0, %v339
      %v341 = vrot.slane %v336, %v340
      %v407 = vunpack.c.l.b16 %v256
      %v408 = vunpack.c.l.b16 %v257
      %v409 = vunpack.c.l.b16 %v258
      %v410 = vunpack.c.l.b16 %v259
      %v411 = vunpack.c.l.b16 %v260
      %v412 = vunpack.c.l.b16 %v261
      %v413 = vunpack.c.l.b16 %v262
      %v414 = vunpack.c.l.b16 %v263
      %v415 = vunpack.c.l.b16 %v264
      %v416 = vunpack.c.l.b16 %v265
      %v417 = vunpack.c.l.b16 %v266
      %v418 = vunpack.c.l.b16 %v267
      %v419 = vunpack.c.l.b16 %v268
      %v420 = vunpack.c.l.b16 %v269
      %v421 = vunpack.c.l.b16 %v270
      %v422 = vunpack.c.l.b16 %v271
      %v423 = vunpack.c.l.b16 %v272
      %v424 = vunpack.c.l.b16 %v273
      %v425 = vunpack.c.l.b16 %v274
      %v426 = vunpack.c.l.b16 %v275
      %v427 = vunpack.c.l.b16 %v276
      %v428 = vunpack.c.l.b16 %v277
      %v429 = vunpack.c.l.b16 %v278
      %v430 = vunpack.c.l.b16 %v279
      %v431 = vunpack.c.l.b16 %v280
      %v432 = vunpack.c.l.b16 %v281
      %v433 = vunpack.c.l.b16 %v282
      %v434 = vunpack.c.l.b16 %v283
      %v435 = vunpack.c.l.b16 %v284
      %v436 = vunpack.c.l.b16 %v285
      %v437 = vunpack.c.l.b16 %v286
      %v438 = vunpack.c.l.b16 %v287
      %v439 = vunpack.c.l.b16 %v288
      %v440 = vunpack.c.l.b16 %v289
      %v441 = vunpack.c.l.b16 %v290
      %v442 = vunpack.c.l.b16 %v291
      %v443 = vunpack.c.l.b16 %v292
      %v444 = vunpack.c.l.b16 %v293
      %v445 = vunpack.c.l.b16 %v294
      %v446 = vunpack.c.l.b16 %v295
      %v447 = vunpack.c.l.b16 %v296
      %v448 = vunpack.c.l.b16 %v297
      %v449 = vunpack.c.l.b16 %v298
      %v450 = vunpack.c.l.b16 %v299
      %v451 = vunpack.c.l.b16 %v300
      %v452 = vunpack.c.l.b16 %v301
      %v453 = vunpack.c.l.b16 %v302
      %v454 = vunpack.c.l.b16 %v303
      %v455 = vunpack.c.l.b16 %v304
      %v456 = vunpack.c.l.b16 %v305
      %v457 = vunpack.c.l.b16 %v306
      %v458 = vunpack.c.l.b16 %v307
      %v459 = vunpack.c.l.b16 %v308
      %v460 = vunpack.c.l.b16 %v309
      %v461 = vunpack.c.l.b16 %v310
      %v462 = vunpack.c.l.b16 %v311
      %v463 = vunpack.c.l.b16 %v312
      %v464 = vunpack.c.l.b16 %v313
      %v465 = vunpack.c.l.b16 %v314
      %v466 = vunpack.c.l.b16 %v315
      %v467 = vunpack.c.l.b16 %v316
      %v468 = vunpack.c.l.b16 %v317
      %v469 = vunpack.c.l.b16 %v318
      %v470 = vunpack.c.l.b16 %v319
      %v471 = vpack.c.b16 %v408, %v407
      %v472 = vpack.c.b16 %v410, %v409
      %v473 = vpack.c.b16 %v412, %v411
      %v474 = vpack.c.b16 %v414, %v413
      %v475 = vpack.c.b16 %v416, %v415
      %v476 = vpack.c.b16 %v418, %v417
      %v477 = vpack.c.b16 %v420, %v419
      %v478 = vpack.c.b16 %v422, %v421
      %v479 = vpack.c.b16 %v424, %v423
      %v480 = vpack.c.b16 %v426, %v425
      %v481 = vpack.c.b16 %v428, %v427
      %v482 = vpack.c.b16 %v430, %v429
      %v483 = vpack.c.b16 %v432, %v431
      %v484 = vpack.c.b16 %v434, %v433
      %v485 = vpack.c.b16 %v436, %v435
      %v486 = vpack.c.b16 %v438, %v437
      %v487 = vpack.c.b16 %v440, %v439
      %v488 = vpack.c.b16 %v442, %v441
      %v489 = vpack.c.b16 %v444, %v443
      %v490 = vpack.c.b16 %v446, %v445
      %v491 = vpack.c.b16 %v448, %v447
      %v492 = vpack.c.b16 %v450, %v449
      %v493 = vpack.c.b16 %v452, %v451
      %v494 = vpack.c.b16 %v454, %v453
      %v495 = vpack.c.b16 %v456, %v455
      %v496 = vpack.c.b16 %v458, %v457
      %v497 = vpack.c.b16 %v460, %v459
      %v498 = vpack.c.b16 %v462, %v461
      %v499 = vpack.c.b16 %v464, %v463
      %v500 = vpack.c.b16 %v466, %v465
      %v501 = vpack.c.b16 %v468, %v467
      %v502 = vpack.c.b16 %v470, %v469
      %v551 = vunpack.c.l.b16 %v320
      %v552 = vunpack.c.l.b16 %v321
      %v553 = vunpack.c.l.b16 %v322
      %v554 = vunpack.c.l.b16 %v323
      %v555 = vunpack.c.l.b16 %v324
      %v556 = vunpack.c.l.b16 %v325
      %v557 = vunpack.c.l.b16 %v326
      %v558 = vunpack.c.l.b16 %v327
      %v559 = vunpack.c.l.b16 %v328
      %v560 = vunpack.c.l.b16 %v329
      %v561 = vunpack.c.l.b16 %v330
      %v562 = vunpack.c.l.b16 %v331
      %v563 = vunpack.c.l.b16 %v332
      %v564 = vunpack.c.l.b16 %v333
      %v565 = vunpack.c.l.b16 %v334
      %v566 = vunpack.c.l.b16 %v335
      %v567 = vpack.c.b16 %v552, %v551
      %v568 = vpack.c.b16 %v554, %v553
      %v569 = vpack.c.b16 %v556, %v555
      %v570 = vpack.c.b16 %v558, %v557
      %v571 = vpack.c.b16 %v560, %v559
      %v572 = vpack.c.b16 %v562, %v561
      %v573 = vpack.c.b16 %v564, %v563
      %v574 = vpack.c.b16 %v566, %v565
      %583 = vmatprep.subr.bf16.mxu0 0
      %584 = vmatpush1.bf16.msra.mxu0 %v567
      %585 = vmatprep.subr.bf16.mxu0 0
      %586 = vmatpush1.bf16.msra.mxu0 %v568
      %587 = vmatprep.subr.bf16.mxu0 0
      %588 = vmatpush1.bf16.msra.mxu0 %v569
      %589 = vmatprep.subr.bf16.mxu0 0
      %590 = vmatpush1.bf16.msra.mxu0 %v570
      %591 = vmatprep.subr.bf16.mxu0 0
      %592 = vmatpush1.bf16.msra.mxu0 %v571
      %593 = vmatprep.subr.bf16.mxu0 0
      %594 = vmatpush1.bf16.msra.mxu0 %v572
      %595 = vmatprep.subr.bf16.mxu0 0
      %596 = vmatpush1.bf16.msra.mxu0 %v573
      %597 = vmatprep.subr.bf16.mxu0 0
      %598 = vmatpush1.bf16.msra.mxu0 %v574
      %599 = vmatprep.subr.bf16.mxu0 0
      %600 = vmatpush1.bf16.msra.mxu0 0
      %601 = vmatprep.subr.bf16.mxu0 0
      %602 = vmatpush1.bf16.msra.mxu0 0
      %603 = vmatprep.subr.bf16.mxu0 0
      %604 = vmatpush1.bf16.msra.mxu0 0
      %605 = vmatprep.subr.bf16.mxu0 0
      %606 = vmatpush1.bf16.msra.mxu0 0
      %607 = vmatprep.subr.bf16.mxu0 0
      %608 = vmatpush1.bf16.msra.mxu0 0
      %609 = vmatprep.subr.bf16.mxu0 0
      %610 = vmatpush1.bf16.msra.mxu0 0
      %611 = vmatprep.subr.bf16.mxu0 0
      %612 = vmatpush1.bf16.msra.mxu0 0
      %613 = vmatprep.subr.bf16.mxu0 0
      %614 = vmatpush1.bf16.msra.mxu0 0
      %615 = vmatprep.mubr.bf16.mxu0 0
      %616 = vmatmul.mubr.bf16.gmra.mrb[0].mxu0 %v471
      %v617 = vpop.f32.mrb[0].mxu0
      %v618 = vadd.f32 %v341, %v617
      %v619 = vpop.f32.mrb[0].mxu0
      %v620 = vpop.f32.mrb[0].mxu0
      %v621 = vadd.f32 %v341, %v620
      %v622 = vpop.f32.mrb[0].mxu0
      %623 = vmatprep.mubr.bf16.mxu0 0
      %624 = vmatmul.mubr.bf16.gmra.mrb[0].mxu0 %v472
      %v625 = vpop.f32.mrb[0].mxu0
      %v626 = vadd.f32 %v341, %v625
      %v627 = vpop.f32.mrb[0].mxu0
      %v628 = vpop.f32.mrb[0].mxu0
      %v629 = vadd.f32 %v341, %v628
      %v630 = vpop.f32.mrb[0].mxu0
      %631 = vmatprep.mubr.bf16.mxu0 0
      %632 = vmatmul.mubr.bf16.gmra.mrb[0].mxu0 %v473
      %v633 = vpop.f32.mrb[0].mxu0
      %v634 = vadd.f32 %v341, %v633
      %v635 = vpop.f32.mrb[0].mxu0
      %v636 = vpop.f32.mrb[0].mxu0
      %v637 = vadd.f32 %v341, %v636
      %v638 = vpop.f32.mrb[0].mxu0
      %639 = vmatprep.mubr.bf16.mxu0 0
      %640 = vmatmul.mubr.bf16.gmra.mrb[0].mxu0 %v474
      %v641 = vpop.f32.mrb[0].mxu0
      %v642 = vadd.f32 %v341, %v641
      %v643 = vpop.f32.mrb[0].mxu0
      %v644 = vpop.f32.mrb[0].mxu0
      %v645 = vadd.f32 %v341, %v644
      %v646 = vpop.f32.mrb[0].mxu0
      %647 = vmatprep.mubr.bf16.mxu0 0
      %648 = vmatmul.mubr.bf16.gmra.mrb[0].mxu0 %v475
      %v649 = vpop.f32.mrb[0].mxu0
      %v650 = vadd.f32 %v341, %v649
      %v651 = vpop.f32.mrb[0].mxu0
      %v652 = vpop.f32.mrb[0].mxu0
      %v653 = vadd.f32 %v341, %v652
      %v654 = vpop.f32.mrb[0].mxu0
      %655 = vmatprep.mubr.bf16.mxu0 0
      %656 = vmatmul.mubr.bf16.gmra.mrb[0].mxu0 %v476
      %v657 = vpop.f32.mrb[0].mxu0
      %v658 = vadd.f32 %v341, %v657
      %v659 = vpop.f32.mrb[0].mxu0
      %v660 = vpop.f32.mrb[0].mxu0
      %v661 = vadd.f32 %v341, %v660
      %v662 = vpop.f32.mrb[0].mxu0
      %663 = vmatprep.mubr.bf16.mxu0 0
      %664 = vmatmul.mubr.bf16.gmra.mrb[0].mxu0 %v477
      %v665 = vpop.f32.mrb[0].mxu0
      %v666 = vadd.f32 %v341, %v665
      %v667 = vpop.f32.mrb[0].mxu0
      %v668 = vpop.f32.mrb[0].mxu0
      %v669 = vadd.f32 %v341, %v668
      %v670 = vpop.f32.mrb[0].mxu0
      %671 = vmatprep.mubr.bf16.mxu0 0
      %672 = vmatmul.mubr.bf16.gmra.mrb[0].mxu0 %v478
      %v673 = vpop.f32.mrb[0].mxu0
      %v674 = vadd.f32 %v341, %v673
      %v675 = vpop.f32.mrb[0].mxu0
      %v676 = vpop.f32.mrb[0].mxu0
      %v677 = vadd.f32 %v341, %v676
      %v678 = vpop.f32.mrb[0].mxu0
      %679 = vmatprep.mubr.bf16.mxu0 0
      %680 = vmatmul.mubr.bf16.gmra.mrb[0].mxu0 %v479
      %v681 = vpop.f32.mrb[0].mxu0
      %v682 = vadd.f32 %v341, %v681
      %v683 = vpop.f32.mrb[0].mxu0
      %v684 = vpop.f32.mrb[0].mxu0
      %v685 = vadd.f32 %v341, %v684
      %v686 = vpop.f32.mrb[0].mxu0
      %687 = vmatprep.mubr.bf16.mxu0 0
      %688 = vmatmul.mubr.bf16.gmra.mrb[0].mxu0 %v480
      %v689 = vpop.f32.mrb[0].mxu0
      %v690 = vadd.f32 %v341, %v689
      %v691 = vpop.f32.mrb[0].mxu0
      %v692 = vpop.f32.mrb[0].mxu0
      %v693 = vadd.f32 %v341, %v692
      %v694 = vpop.f32.mrb[0].mxu0
      %695 = vmatprep.mubr.bf16.mxu0 0
      %696 = vmatmul.mubr.bf16.gmra.mrb[0].mxu0 %v481
      %v697 = vpop.f32.mrb[0].mxu0
      %v698 = vadd.f32 %v341, %v697
      %v699 = vpop.f32.mrb[0].mxu0
      %v700 = vpop.f32.mrb[0].mxu0
      %v701 = vadd.f32 %v341, %v700
      %v702 = vpop.f32.mrb[0].mxu0
      %703 = vmatprep.mubr.bf16.mxu0 0
      %704 = vmatmul.mubr.bf16.gmra.mrb[0].mxu0 %v482
      %v705 = vpop.f32.mrb[0].mxu0
      %v706 = vadd.f32 %v341, %v705
      %v707 = vpop.f32.mrb[0].mxu0
      %v708 = vpop.f32.mrb[0].mxu0
      %v709 = vadd.f32 %v341, %v708
      %v710 = vpop.f32.mrb[0].mxu0
      %711 = vmatprep.mubr.bf16.mxu0 0
      %712 = vmatmul.mubr.bf16.gmra.mrb[0].mxu0 %v483
      %v713 = vpop.f32.mrb[0].mxu0
      %v714 = vadd.f32 %v341, %v713
      %v715 = vpop.f32.mrb[0].mxu0
      %v716 = vpop.f32.mrb[0].mxu0
      %v717 = vadd.f32 %v341, %v716
      %v718 = vpop.f32.mrb[0].mxu0
      %719 = vmatprep.mubr.bf16.mxu0 0
      %720 = vmatmul.mubr.bf16.gmra.mrb[0].mxu0 %v484
      %v721 = vpop.f32.mrb[0].mxu0
      %v722 = vadd.f32 %v341, %v721
      %v723 = vpop.f32.mrb[0].mxu0
      %v724 = vpop.f32.mrb[0].mxu0
      %v725 = vadd.f32 %v341, %v724
      %v726 = vpop.f32.mrb[0].mxu0
      %727 = vmatprep.mubr.bf16.mxu0 0
      %728 = vmatmul.mubr.bf16.gmra.mrb[0].mxu0 %v485
      %v729 = vpop.f32.mrb[0].mxu0
      %v730 = vadd.f32 %v341, %v729
      %v731 = vpop.f32.mrb[0].mxu0
      %v732 = vpop.f32.mrb[0].mxu0
      %v733 = vadd.f32 %v341, %v732
      %v734 = vpop.f32.mrb[0].mxu0
      %735 = vmatprep.mubr.bf16.mxu0 0
      %736 = vmatmul.mubr.bf16.gmra.mrb[0].mxu0 %v486
      %v737 = vpop.f32.mrb[0].mxu0
      %v738 = vadd.f32 %v341, %v737
      %v739 = vpop.f32.mrb[0].mxu0
      %v740 = vpop.f32.mrb[0].mxu0
      %v741 = vadd.f32 %v341, %v740
      %v742 = vpop.f32.mrb[0].mxu0
      %743 = vmatprep.mubr.bf16.mxu0 0
      %744 = vmatmul.mubr.bf16.gmra.mrb[0].mxu0 %v487
      %v745 = vpop.f32.mrb[0].mxu0
      %v746 = vadd.f32 %v341, %v745
      %v747 = vpop.f32.mrb[0].mxu0
      %v748 = vpop.f32.mrb[0].mxu0
      %v749 = vadd.f32 %v341, %v748
      %v750 = vpop.f32.mrb[0].mxu0
      %751 = vmatprep.mubr.bf16.mxu0 0
      %752 = vmatmul.mubr.bf16.gmra.mrb[0].mxu0 %v488
      %v753 = vpop.f32.mrb[0].mxu0
      %v754 = vadd.f32 %v341, %v753
      %v755 = vpop.f32.mrb[0].mxu0
      %v756 = vpop.f32.mrb[0].mxu0
      %v757 = vadd.f32 %v341, %v756
      %v758 = vpop.f32.mrb[0].mxu0
      %759 = vmatprep.mubr.bf16.mxu0 0
      %760 = vmatmul.mubr.bf16.gmra.mrb[0].mxu0 %v489
      %v761 = vpop.f32.mrb[0].mxu0
      %v762 = vadd.f32 %v341, %v761
      %v763 = vpop.f32.mrb[0].mxu0
      %v764 = vpop.f32.mrb[0].mxu0
      %v765 = vadd.f32 %v341, %v764
      %v766 = vpop.f32.mrb[0].mxu0
      %767 = vmatprep.mubr.bf16.mxu0 0
      %768 = vmatmul.mubr.bf16.gmra.mrb[0].mxu0 %v490
      %v769 = vpop.f32.mrb[0].mxu0
      %v770 = vadd.f32 %v341, %v769
      %v771 = vpop.f32.mrb[0].mxu0
      %v772 = vpop.f32.mrb[0].mxu0
      %v773 = vadd.f32 %v341, %v772
      %v774 = vpop.f32.mrb[0].mxu0
      %775 = vmatprep.mubr.bf16.mxu0 0
      %776 = vmatmul.mubr.bf16.gmra.mrb[0].mxu0 %v491
      %v777 = vpop.f32.mrb[0].mxu0
      %v778 = vadd.f32 %v341, %v777
      %v779 = vpop.f32.mrb[0].mxu0
      %v780 = vpop.f32.mrb[0].mxu0
      %v781 = vadd.f32 %v341, %v780
      %v782 = vpop.f32.mrb[0].mxu0
      %783 = vmatprep.mubr.bf16.mxu0 0
      %784 = vmatmul.mubr.bf16.gmra.mrb[0].mxu0 %v492
      %v785 = vpop.f32.mrb[0].mxu0
      %v786 = vadd.f32 %v341, %v785
      %v787 = vpop.f32.mrb[0].mxu0
      %v788 = vpop.f32.mrb[0].mxu0
      %v789 = vadd.f32 %v341, %v788
      %v790 = vpop.f32.mrb[0].mxu0
      %791 = vmatprep.mubr.bf16.mxu0 0
      %792 = vmatmul.mubr.bf16.gmra.mrb[0].mxu0 %v493
      %v793 = vpop.f32.mrb[0].mxu0
      %v794 = vadd.f32 %v341, %v793
      %v795 = vpop.f32.mrb[0].mxu0
      %v796 = vpop.f32.mrb[0].mxu0
      %v797 = vadd.f32 %v341, %v796
      %v798 = vpop.f32.mrb[0].mxu0
      %799 = vmatprep.mubr.bf16.mxu0 0
      %800 = vmatmul.mubr.bf16.gmra.mrb[0].mxu0 %v494
      %v801 = vpop.f32.mrb[0].mxu0
      %v802 = vadd.f32 %v341, %v801
      %v803 = vpop.f32.mrb[0].mxu0
      %v804 = vpop.f32.mrb[0].mxu0
      %v805 = vadd.f32 %v341, %v804
      %v806 = vpop.f32.mrb[0].mxu0
      %807 = vmatprep.mubr.bf16.mxu0 0
      %808 = vmatmul.mubr.bf16.gmra.mrb[0].mxu0 %v495
      %v809 = vpop.f32.mrb[0].mxu0
      %v810 = vadd.f32 %v341, %v809
      %v811 = vpop.f32.mrb[0].mxu0
      %v812 = vpop.f32.mrb[0].mxu0
      %v813 = vadd.f32 %v341, %v812
      %v814 = vpop.f32.mrb[0].mxu0
      %815 = vmatprep.mubr.bf16.mxu0 0
      %816 = vmatmul.mubr.bf16.gmra.mrb[0].mxu0 %v496
      %v817 = vpop.f32.mrb[0].mxu0
      %v818 = vadd.f32 %v341, %v817
      %v819 = vpop.f32.mrb[0].mxu0
      %v820 = vpop.f32.mrb[0].mxu0
      %v821 = vadd.f32 %v341, %v820
      %v822 = vpop.f32.mrb[0].mxu0
      %823 = vmatprep.mubr.bf16.mxu0 0
      %824 = vmatmul.mubr.bf16.gmra.mrb[0].mxu0 %v497
      %v825 = vpop.f32.mrb[0].mxu0
      %v826 = vadd.f32 %v341, %v825
      %v827 = vpop.f32.mrb[0].mxu0
      %v828 = vpop.f32.mrb[0].mxu0
      %v829 = vadd.f32 %v341, %v828
      %v830 = vpop.f32.mrb[0].mxu0
      %831 = vmatprep.mubr.bf16.mxu0 0
      %832 = vmatmul.mubr.bf16.gmra.mrb[0].mxu0 %v498
      %v833 = vpop.f32.mrb[0].mxu0
      %v834 = vadd.f32 %v341, %v833
      %v835 = vpop.f32.mrb[0].mxu0
      %v836 = vpop.f32.mrb[0].mxu0
      %v837 = vadd.f32 %v341, %v836
      %v838 = vpop.f32.mrb[0].mxu0
      %839 = vmatprep.mubr.bf16.mxu0 0
      %840 = vmatmul.mubr.bf16.gmra.mrb[0].mxu0 %v499
      %v841 = vpop.f32.mrb[0].mxu0
      %v842 = vadd.f32 %v341, %v841
      %v843 = vpop.f32.mrb[0].mxu0
      %v844 = vpop.f32.mrb[0].mxu0
      %v845 = vadd.f32 %v341, %v844
      %v846 = vpop.f32.mrb[0].mxu0
      %847 = vmatprep.mubr.bf16.mxu0 0
      %848 = vmatmul.mubr.bf16.gmra.mrb[0].mxu0 %v500
      %v849 = vpop.f32.mrb[0].mxu0
      %v850 = vadd.f32 %v341, %v849
      %v851 = vpop.f32.mrb[0].mxu0
      %v852 = vpop.f32.mrb[0].mxu0
      %v853 = vadd.f32 %v341, %v852
      %v854 = vpop.f32.mrb[0].mxu0
      %855 = vmatprep.mubr.bf16.mxu0 0
      %856 = vmatmul.mubr.bf16.gmra.mrb[0].mxu0 %v501
      %v857 = vpop.f32.mrb[0].mxu0
      %v858 = vadd.f32 %v341, %v857
      %v859 = vpop.f32.mrb[0].mxu0
      %v860 = vpop.f32.mrb[0].mxu0
      %v861 = vadd.f32 %v341, %v860
      %v862 = vpop.f32.mrb[0].mxu0
      %863 = vmatprep.mubr.bf16.mxu0 0
      %864 = vmatmul.mubr.bf16.gmra.mrb[0].mxu0 %v502
      %v865 = vpop.f32.mrb[0].mxu0
      %v866 = vadd.f32 %v341, %v865
      %v867 = vpop.f32.mrb[0].mxu0
      %v868 = vpop.f32.mrb[0].mxu0
      %v869 = vadd.f32 %v341, %v868
      %v870 = vpop.f32.mrb[0].mxu0
      %871 = vdwg.mxu0
      %v872 = vmax.f32 %v618, 0.0
      %v873 = vmax.f32 %v621, 0.0
      %v874 = vmax.f32 %v626, 0.0
      %v875 = vmax.f32 %v629, 0.0
      %v876 = vmax.f32 %v634, 0.0
      %v877 = vmax.f32 %v637, 0.0
      %v878 = vmax.f32 %v642, 0.0
      %v879 = vmax.f32 %v645, 0.0
      %v880 = vmax.f32 %v650, 0.0
      %v881 = vmax.f32 %v653, 0.0
      %v882 = vmax.f32 %v658, 0.0
      %v883 = vmax.f32 %v661, 0.0
      %v884 = vmax.f32 %v666, 0.0
      %v885 = vmax.f32 %v669, 0.0
      %v886 = vmax.f32 %v674, 0.0
      %v887 = vmax.f32 %v677, 0.0
      %v888 = vmax.f32 %v682, 0.0
      %v889 = vmax.f32 %v685, 0.0
      %v890 = vmax.f32 %v690, 0.0
      %v891 = vmax.f32 %v693, 0.0
      %v892 = vmax.f32 %v698, 0.0
      %v893 = vmax.f32 %v701, 0.0
      %v894 = vmax.f32 %v706, 0.0
      %v895 = vmax.f32 %v709, 0.0
      %v896 = vmax.f32 %v714, 0.0
      %v897 = vmax.f32 %v717, 0.0
      %v898 = vmax.f32 %v722, 0.0
      %v899 = vmax.f32 %v725, 0.0
      %v900 = vmax.f32 %v730, 0.0
      %v901 = vmax.f32 %v733, 0.0
      %v902 = vmax.f32 %v738, 0.0
      %v903 = vmax.f32 %v741, 0.0
      %v904 = vmax.f32 %v746, 0.0
      %v905 = vmax.f32 %v749, 0.0
      %v906 = vmax.f32 %v754, 0.0
      %v907 = vmax.f32 %v757, 0.0
      %v908 = vmax.f32 %v762, 0.0
      %v909 = vmax.f32 %v765, 0.0
      %v910 = vmax.f32 %v770, 0.0
      %v911 = vmax.f32 %v773, 0.0
      %v912 = vmax.f32 %v778, 0.0
      %v913 = vmax.f32 %v781, 0.0
      %v914 = vmax.f32 %v786, 0.0
      %v915 = vmax.f32 %v789, 0.0
      %v916 = vmax.f32 %v794, 0.0
      %v917 = vmax.f32 %v797, 0.0
      %v918 = vmax.f32 %v802, 0.0
      %v919 = vmax.f32 %v805, 0.0
      %v920 = vmax.f32 %v810, 0.0
      %v921 = vmax.f32 %v813, 0.0
      %v922 = vmax.f32 %v818, 0.0
      %v923 = vmax.f32 %v821, 0.0
      %v924 = vmax.f32 %v826, 0.0
      %v925 = vmax.f32 %v829, 0.0
      %v926 = vmax.f32 %v834, 0.0
      %v927 = vmax.f32 %v837, 0.0
      %v928 = vmax.f32 %v842, 0.0
      %v929 = vmax.f32 %v845, 0.0
      %v930 = vmax.f32 %v850, 0.0
      %v931 = vmax.f32 %v853, 0.0
      %v932 = vmax.f32 %v858, 0.0
      %v933 = vmax.f32 %v861, 0.0
      %v934 = vmax.f32 %v866, 0.0
      %v935 = vmax.f32 %v869, 0.0
      %v936 = vunpack.c.l.bf16 %v256
      %v937 = vunpack.c.l.bf16 %v257
      %v938 = vunpack.c.l.bf16 %v258
      %v939 = vunpack.c.l.bf16 %v259
      %v940 = vunpack.c.l.bf16 %v260
      %v941 = vunpack.c.l.bf16 %v261
      %v942 = vunpack.c.l.bf16 %v262
      %v943 = vunpack.c.l.bf16 %v263
      %v944 = vunpack.c.l.bf16 %v264
      %v945 = vunpack.c.l.bf16 %v265
      %v946 = vunpack.c.l.bf16 %v266
      %v947 = vunpack.c.l.bf16 %v267
      %v948 = vunpack.c.l.bf16 %v268
      %v949 = vunpack.c.l.bf16 %v269
      %v950 = vunpack.c.l.bf16 %v270
      %v951 = vunpack.c.l.bf16 %v271
      %v952 = vunpack.c.l.bf16 %v272
      %v953 = vunpack.c.l.bf16 %v273
      %v954 = vunpack.c.l.bf16 %v274
      %v955 = vunpack.c.l.bf16 %v275
      %v956 = vunpack.c.l.bf16 %v276
      %v957 = vunpack.c.l.bf16 %v277
      %v958 = vunpack.c.l.bf16 %v278
      %v959 = vunpack.c.l.bf16 %v279
      %v960 = vunpack.c.l.bf16 %v280
      %v961 = vunpack.c.l.bf16 %v281
      %v962 = vunpack.c.l.bf16 %v282
      %v963 = vunpack.c.l.bf16 %v283
      %v964 = vunpack.c.l.bf16 %v284
      %v965 = vunpack.c.l.bf16 %v285
      %v966 = vunpack.c.l.bf16 %v286
      %v967 = vunpack.c.l.bf16 %v287
      %v968 = vunpack.c.l.bf16 %v288
      %v969 = vunpack.c.l.bf16 %v289
      %v970 = vunpack.c.l.bf16 %v290
      %v971 = vunpack.c.l.bf16 %v291
      %v972 = vunpack.c.l.bf16 %v292
      %v973 = vunpack.c.l.bf16 %v293
      %v974 = vunpack.c.l.bf16 %v294
      %v975 = vunpack.c.l.bf16 %v295
      %v976 = vunpack.c.l.bf16 %v296
      %v977 = vunpack.c.l.bf16 %v297
      %v978 = vunpack.c.l.bf16 %v298
      %v979 = vunpack.c.l.bf16 %v299
      %v980 = vunpack.c.l.bf16 %v300
      %v981 = vunpack.c.l.bf16 %v301
      %v982 = vunpack.c.l.bf16 %v302
      %v983 = vunpack.c.l.bf16 %v303
      %v984 = vunpack.c.l.bf16 %v304
      %v985 = vunpack.c.l.bf16 %v305
      %v986 = vunpack.c.l.bf16 %v306
      %v987 = vunpack.c.l.bf16 %v307
      %v988 = vunpack.c.l.bf16 %v308
      %v989 = vunpack.c.l.bf16 %v309
      %v990 = vunpack.c.l.bf16 %v310
      %v991 = vunpack.c.l.bf16 %v311
      %v992 = vunpack.c.l.bf16 %v312
      %v993 = vunpack.c.l.bf16 %v313
      %v994 = vunpack.c.l.bf16 %v314
      %v995 = vunpack.c.l.bf16 %v315
      %v996 = vunpack.c.l.bf16 %v316
      %v997 = vunpack.c.l.bf16 %v317
      %v998 = vunpack.c.l.bf16 %v318
      %v999 = vunpack.c.l.bf16 %v319
      %v1000 = vld [vmem:[%s3] sm:$0xff]
      %v1001 = vld [vmem:[%s3 + $0x8] sm:$0xff]
      %v1002 = vld [vmem:[%s3 + $0x10] sm:$0xff]
      %v1003 = vld [vmem:[%s3 + $0x18] sm:$0xff]
      %v1004 = vld [vmem:[%s3 + $0x20] sm:$0xff]
      %v1005 = vld [vmem:[%s3 + $0x28] sm:$0xff]
      %v1006 = vld [vmem:[%s3 + $0x30] sm:$0xff]
      %v1007 = vld [vmem:[%s3 + $0x38] sm:$0xff]
      %v1008 = vld [vmem:[%s4] sm:$0xff]
      %v1009 = vld [vmem:[%s4 + $0x8] sm:$0xff]
      %v1010 = vld [vmem:[%s4 + $0x10] sm:$0xff]
      %v1011 = vld [vmem:[%s4 + $0x18] sm:$0xff]
      %v1012 = vld [vmem:[%s4 + $0x20] sm:$0xff]
      %v1013 = vld [vmem:[%s4 + $0x28] sm:$0xff]
      %v1014 = vld [vmem:[%s4 + $0x30] sm:$0xff]
      %v1015 = vld [vmem:[%s4 + $0x38] sm:$0xff]
      %v1016 = vld [vmem:[%s4 + $0x40] sm:$0xff]
      %v1017 = vld [vmem:[%s4 + $0x48] sm:$0xff]
      %v1018 = vld [vmem:[%s4 + $0x50] sm:$0xff]
      %v1019 = vld [vmem:[%s4 + $0x58] sm:$0xff]
      %v1020 = vld [vmem:[%s4 + $0x60] sm:$0xff]
      %v1021 = vld [vmem:[%s4 + $0x68] sm:$0xff]
      %v1022 = vld [vmem:[%s4 + $0x70] sm:$0xff]
      %v1023 = vld [vmem:[%s4 + $0x78] sm:$0xff]
      %1024 = vmatprep.subr.mxu0 0.0
      %1025 = vmatpush1.msra.mxu0 %v1008
      %1026 = vmatprep.subr.mxu0 0.0
      %1027 = vmatpush1.msra.mxu0 %v1009
      %1028 = vmatprep.subr.mxu0 0.0
      %1029 = vmatpush1.msra.mxu0 %v1010
      %1030 = vmatprep.subr.mxu0 0.0
      %1031 = vmatpush1.msra.mxu0 %v1011
      %1032 = vmatprep.subr.mxu0 0.0
      %1033 = vmatpush1.msra.mxu0 %v1012
      %1034 = vmatprep.subr.mxu0 0.0
      %1035 = vmatpush1.msra.mxu0 %v1013
      %1036 = vmatprep.subr.mxu0 0.0
      %1037 = vmatpush1.msra.mxu0 %v1014
      %1038 = vmatprep.subr.mxu0 0.0
      %1039 = vmatpush1.msra.mxu0 %v1015
      %1040 = vmatprep.subr.mxu0 0.0
      %1041 = vmatpush1.msra.mxu0 %v1016
      %1042 = vmatprep.subr.mxu0 0.0
      %1043 = vmatpush1.msra.mxu0 %v1017
      %1044 = vmatprep.subr.mxu0 0.0
      %1045 = vmatpush1.msra.mxu0 %v1018
      %1046 = vmatprep.subr.mxu0 0.0
      %1047 = vmatpush1.msra.mxu0 %v1019
      %1048 = vmatprep.subr.mxu0 0.0
      %1049 = vmatpush1.msra.mxu0 %v1020
      %1050 = vmatprep.subr.mxu0 0.0
      %1051 = vmatpush1.msra.mxu0 %v1021
      %1052 = vmatprep.subr.mxu0 0.0
      %1053 = vmatpush1.msra.mxu0 %v1022
      %1054 = vmatprep.subr.mxu0 0.0
      %1055 = vmatpush1.msra.mxu0 %v1023
      %1056 = vmatprep.subr.mxu0 0.0
      %1057 = vmatpush1.msra.mxu0 0.0
      %1058 = vmatprep.subr.mxu0 0.0
      %1059 = vmatpush1.msra.mxu0 0.0
      %1060 = vmatprep.subr.mxu0 0.0
      %1061 = vmatpush1.msra.mxu0 0.0
      %1062 = vmatprep.subr.mxu0 0.0
      %1063 = vmatpush1.msra.mxu0 0.0
      %1064 = vmatprep.subr.mxu0 0.0
      %1065 = vmatpush1.msra.mxu0 0.0
      %1066 = vmatprep.subr.mxu0 0.0
      %1067 = vmatpush1.msra.mxu0 0.0
      %1068 = vmatprep.subr.mxu0 0.0
      %1069 = vmatpush1.msra.mxu0 0.0
      %1070 = vmatprep.subr.mxu0 0.0
      %1071 = vmatpush1.msra.mxu0 0.0
      %1072 = vmatprep.subr.mxu0 0.0
      %1073 = vmatpush1.msra.mxu0 0.0
      %1074 = vmatprep.subr.mxu0 0.0
      %1075 = vmatpush1.msra.mxu0 0.0
      %1076 = vmatprep.subr.mxu0 0.0
      %1077 = vmatpush1.msra.mxu0 0.0
      %1078 = vmatprep.subr.mxu0 0.0
      %1079 = vmatpush1.msra.mxu0 0.0
      %1080 = vmatprep.subr.mxu0 0.0
      %1081 = vmatpush1.msra.mxu0 0.0
      %1082 = vmatprep.subr.mxu0 0.0
      %1083 = vmatpush1.msra.mxu0 0.0
      %1084 = vmatprep.subr.mxu0 0.0
      %1085 = vmatpush1.msra.mxu0 0.0
      %1086 = vmatprep.subr.mxu0 0.0
      %1087 = vmatpush1.msra.mxu0 0.0
      %1088 = vmatprep.mubr.f32.mxu0 0.0
      %1089 = vmatmul.mubr.f32.gmra.mrb[0].mxu0 %v936
      %v1090 = vpop.f32.mrb[0].mxu0
      %v1091 = vadd.f32 0.0, %v1090
      %v1092 = vpop.f32.mrb[0].mxu0
      %1093 = vmatprep.mubr.f32.mxu0 0.0
      %1094 = vmatmul.mubr.f32.gmra.mrb[0].mxu0 %v937
      %v1095 = vpop.f32.mrb[0].mxu0
      %v1096 = vadd.f32 0.0, %v1095
      %v1097 = vpop.f32.mrb[0].mxu0
      %1098 = vmatprep.mubr.f32.mxu0 0.0
      %1099 = vmatmul.mubr.f32.gmra.mrb[0].mxu0 %v938
      %v1100 = vpop.f32.mrb[0].mxu0
      %v1101 = vadd.f32 0.0, %v1100
      %v1102 = vpop.f32.mrb[0].mxu0
      %1103 = vmatprep.mubr.f32.mxu0 0.0
      %1104 = vmatmul.mubr.f32.gmra.mrb[0].mxu0 %v939
      %v1105 = vpop.f32.mrb[0].mxu0
      %v1106 = vadd.f32 0.0, %v1105
      %v1107 = vpop.f32.mrb[0].mxu0
      %1108 = vmatprep.mubr.f32.mxu0 0.0
      %1109 = vmatmul.mubr.f32.gmra.mrb[0].mxu0 %v940
      %v1110 = vpop.f32.mrb[0].mxu0
      %v1111 = vadd.f32 0.0, %v1110
      %v1112 = vpop.f32.mrb[0].mxu0
      %1113 = vmatprep.mubr.f32.mxu0 0.0
      %1114 = vmatmul.mubr.f32.gmra.mrb[0].mxu0 %v941
      %v1115 = vpop.f32.mrb[0].mxu0
      %v1116 = vadd.f32 0.0, %v1115
      %v1117 = vpop.f32.mrb[0].mxu0
      %1118 = vmatprep.mubr.f32.mxu0 0.0
      %1119 = vmatmul.mubr.f32.gmra.mrb[0].mxu0 %v942
      %v1120 = vpop.f32.mrb[0].mxu0
      %v1121 = vadd.f32 0.0, %v1120
      %v1122 = vpop.f32.mrb[0].mxu0
      %1123 = vmatprep.mubr.f32.mxu0 0.0
      %1124 = vmatmul.mubr.f32.gmra.mrb[0].mxu0 %v943
      %v1125 = vpop.f32.mrb[0].mxu0
      %v1126 = vadd.f32 0.0, %v1125
      %v1127 = vpop.f32.mrb[0].mxu0
      %1128 = vmatprep.mubr.f32.mxu0 0.0
      %1129 = vmatmul.mubr.f32.gmra.mrb[0].mxu0 %v944
      %v1130 = vpop.f32.mrb[0].mxu0
      %v1131 = vadd.f32 0.0, %v1130
      %v1132 = vpop.f32.mrb[0].mxu0
      %1133 = vmatprep.mubr.f32.mxu0 0.0
      %1134 = vmatmul.mubr.f32.gmra.mrb[0].mxu0 %v945
      %v1135 = vpop.f32.mrb[0].mxu0
      %v1136 = vadd.f32 0.0, %v1135
      %v1137 = vpop.f32.mrb[0].mxu0
      %1138 = vmatprep.mubr.f32.mxu0 0.0
      %1139 = vmatmul.mubr.f32.gmra.mrb[0].mxu0 %v946
      %v1140 = vpop.f32.mrb[0].mxu0
      %v1141 = vadd.f32 0.0, %v1140
      %v1142 = vpop.f32.mrb[0].mxu0
      %1143 = vmatprep.mubr.f32.mxu0 0.0
      %1144 = vmatmul.mubr.f32.gmra.mrb[0].mxu0 %v947
      %v1145 = vpop.f32.mrb[0].mxu0
      %v1146 = vadd.f32 0.0, %v1145
      %v1147 = vpop.f32.mrb[0].mxu0
      %1148 = vmatprep.mubr.f32.mxu0 0.0
      %1149 = vmatmul.mubr.f32.gmra.mrb[0].mxu0 %v948
      %v1150 = vpop.f32.mrb[0].mxu0
      %v1151 = vadd.f32 0.0, %v1150
      %v1152 = vpop.f32.mrb[0].mxu0
      %1153 = vmatprep.mubr.f32.mxu0 0.0
      %1154 = vmatmul.mubr.f32.gmra.mrb[0].mxu0 %v949
      %v1155 = vpop.f32.mrb[0].mxu0
      %v1156 = vadd.f32 0.0, %v1155
      %v1157 = vpop.f32.mrb[0].mxu0
      %1158 = vmatprep.mubr.f32.mxu0 0.0
      %1159 = vmatmul.mubr.f32.gmra.mrb[0].mxu0 %v950
      %v1160 = vpop.f32.mrb[0].mxu0
      %v1161 = vadd.f32 0.0, %v1160
      %v1162 = vpop.f32.mrb[0].mxu0
      %1163 = vmatprep.mubr.f32.mxu0 0.0
      %1164 = vmatmul.mubr.f32.gmra.mrb[0].mxu0 %v951
      %v1165 = vpop.f32.mrb[0].mxu0
      %v1166 = vadd.f32 0.0, %v1165
      %v1167 = vpop.f32.mrb[0].mxu0
      %1168 = vmatprep.mubr.f32.mxu0 0.0
      %1169 = vmatmul.mubr.f32.gmra.mrb[0].mxu0 %v952
      %v1170 = vpop.f32.mrb[0].mxu0
      %v1171 = vadd.f32 0.0, %v1170
      %v1172 = vpop.f32.mrb[0].mxu0
      %1173 = vmatprep.mubr.f32.mxu0 0.0
      %1174 = vmatmul.mubr.f32.gmra.mrb[0].mxu0 %v953
      %v1175 = vpop.f32.mrb[0].mxu0
      %v1176 = vadd.f32 0.0, %v1175
      %v1177 = vpop.f32.mrb[0].mxu0
      %1178 = vmatprep.mubr.f32.mxu0 0.0
      %1179 = vmatmul.mubr.f32.gmra.mrb[0].mxu0 %v954
      %v1180 = vpop.f32.mrb[0].mxu0
      %v1181 = vadd.f32 0.0, %v1180
      %v1182 = vpop.f32.mrb[0].mxu0
      %1183 = vmatprep.mubr.f32.mxu0 0.0
      %1184 = vmatmul.mubr.f32.gmra.mrb[0].mxu0 %v955
      %v1185 = vpop.f32.mrb[0].mxu0
      %v1186 = vadd.f32 0.0, %v1185
      %v1187 = vpop.f32.mrb[0].mxu0
      %1188 = vmatprep.mubr.f32.mxu0 0.0
      %1189 = vmatmul.mubr.f32.gmra.mrb[0].mxu0 %v956
      %v1190 = vpop.f32.mrb[0].mxu0
      %v1191 = vadd.f32 0.0, %v1190
      %v1192 = vpop.f32.mrb[0].mxu0
      %1193 = vmatprep.mubr.f32.mxu0 0.0
      %1194 = vmatmul.mubr.f32.gmra.mrb[0].mxu0 %v957
      %v1195 = vpop.f32.mrb[0].mxu0
      %v1196 = vadd.f32 0.0, %v1195
      %v1197 = vpop.f32.mrb[0].mxu0
      %1198 = vmatprep.mubr.f32.mxu0 0.0
      %1199 = vmatmul.mubr.f32.gmra.mrb[0].mxu0 %v958
      %v1200 = vpop.f32.mrb[0].mxu0
      %v1201 = vadd.f32 0.0, %v1200
      %v1202 = vpop.f32.mrb[0].mxu0
      %1203 = vmatprep.mubr.f32.mxu0 0.0
      %1204 = vmatmul.mubr.f32.gmra.mrb[0].mxu0 %v959
      %v1205 = vpop.f32.mrb[0].mxu0
      %v1206 = vadd.f32 0.0, %v1205
      %v1207 = vpop.f32.mrb[0].mxu0
      %1208 = vmatprep.mubr.f32.mxu0 0.0
      %1209 = vmatmul.mubr.f32.gmra.mrb[0].mxu0 %v960
      %v1210 = vpop.f32.mrb[0].mxu0
      %v1211 = vadd.f32 0.0, %v1210
      %v1212 = vpop.f32.mrb[0].mxu0
      %1213 = vmatprep.mubr.f32.mxu0 0.0
      %1214 = vmatmul.mubr.f32.gmra.mrb[0].mxu0 %v961
      %v1215 = vpop.f32.mrb[0].mxu0
      %v1216 = vadd.f32 0.0, %v1215
      %v1217 = vpop.f32.mrb[0].mxu0
      %1218 = vmatprep.mubr.f32.mxu0 0.0
      %1219 = vmatmul.mubr.f32.gmra.mrb[0].mxu0 %v962
      %v1220 = vpop.f32.mrb[0].mxu0
      %v1221 = vadd.f32 0.0, %v1220
      %v1222 = vpop.f32.mrb[0].mxu0
      %1223 = vmatprep.mubr.f32.mxu0 0.0
      %1224 = vmatmul.mubr.f32.gmra.mrb[0].mxu0 %v963
      %v1225 = vpop.f32.mrb[0].mxu0
      %v1226 = vadd.f32 0.0, %v1225
      %v1227 = vpop.f32.mrb[0].mxu0
      %1228 = vmatprep.mubr.f32.mxu0 0.0
      %1229 = vmatmul.mubr.f32.gmra.mrb[0].mxu0 %v964
      %v1230 = vpop.f32.mrb[0].mxu0
      %v1231 = vadd.f32 0.0, %v1230
      %v1232 = vpop.f32.mrb[0].mxu0
      %1233 = vmatprep.mubr.f32.mxu0 0.0
      %1234 = vmatmul.mubr.f32.gmra.mrb[0].mxu0 %v965
      %v1235 = vpop.f32.mrb[0].mxu0
      %v1236 = vadd.f32 0.0, %v1235
      %v1237 = vpop.f32.mrb[0].mxu0
      %1238 = vmatprep.mubr.f32.mxu0 0.0
      %1239 = vmatmul.mubr.f32.gmra.mrb[0].mxu0 %v966
      %v1240 = vpop.f32.mrb[0].mxu0
      %v1241 = vadd.f32 0.0, %v1240
      %v1242 = vpop.f32.mrb[0].mxu0
      %1243 = vmatprep.mubr.f32.mxu0 0.0
      %1244 = vmatmul.mubr.f32.gmra.mrb[0].mxu0 %v967
      %v1245 = vpop.f32.mrb[0].mxu0
      %v1246 = vadd.f32 0.0, %v1245
      %v1247 = vpop.f32.mrb[0].mxu0
      %1248 = vmatprep.mubr.f32.mxu0 0.0
      %1249 = vmatmul.mubr.f32.gmra.mrb[0].mxu0 %v968
      %v1250 = vpop.f32.mrb[0].mxu0
      %v1251 = vadd.f32 0.0, %v1250
      %v1252 = vpop.f32.mrb[0].mxu0
      %1253 = vmatprep.mubr.f32.mxu0 0.0
      %1254 = vmatmul.mubr.f32.gmra.mrb[0].mxu0 %v969
      %v1255 = vpop.f32.mrb[0].mxu0
      %v1256 = vadd.f32 0.0, %v1255
      %v1257 = vpop.f32.mrb[0].mxu0
      %1258 = vmatprep.mubr.f32.mxu0 0.0
      %1259 = vmatmul.mubr.f32.gmra.mrb[0].mxu0 %v970
      %v1260 = vpop.f32.mrb[0].mxu0
      %v1261 = vadd.f32 0.0, %v1260
      %v1262 = vpop.f32.mrb[0].mxu0
      %1263 = vmatprep.mubr.f32.mxu0 0.0
      %1264 = vmatmul.mubr.f32.gmra.mrb[0].mxu0 %v971
      %v1265 = vpop.f32.mrb[0].mxu0
      %v1266 = vadd.f32 0.0, %v1265
      %v1267 = vpop.f32.mrb[0].mxu0
      %1268 = vmatprep.mubr.f32.mxu0 0.0
      %1269 = vmatmul.mubr.f32.gmra.mrb[0].mxu0 %v972
      %v1270 = vpop.f32.mrb[0].mxu0
      %v1271 = vadd.f32 0.0, %v1270
      %v1272 = vpop.f32.mrb[0].mxu0
      %1273 = vmatprep.mubr.f32.mxu0 0.0
      %1274 = vmatmul.mubr.f32.gmra.mrb[0].mxu0 %v973
      %v1275 = vpop.f32.mrb[0].mxu0
      %v1276 = vadd.f32 0.0, %v1275
      %v1277 = vpop.f32.mrb[0].mxu0
      %1278 = vmatprep.mubr.f32.mxu0 0.0
      %1279 = vmatmul.mubr.f32.gmra.mrb[0].mxu0 %v974
      %v1280 = vpop.f32.mrb[0].mxu0
      %v1281 = vadd.f32 0.0, %v1280
      %v1282 = vpop.f32.mrb[0].mxu0
      %1283 = vmatprep.mubr.f32.mxu0 0.0
      %1284 = vmatmul.mubr.f32.gmra.mrb[0].mxu0 %v975
      %v1285 = vpop.f32.mrb[0].mxu0
      %v1286 = vadd.f32 0.0, %v1285
      %v1287 = vpop.f32.mrb[0].mxu0
      %1288 = vmatprep.mubr.f32.mxu0 0.0
      %1289 = vmatmul.mubr.f32.gmra.mrb[0].mxu0 %v976
      %v1290 = vpop.f32.mrb[0].mxu0
      %v1291 = vadd.f32 0.0, %v1290
      %v1292 = vpop.f32.mrb[0].mxu0
      %1293 = vmatprep.mubr.f32.mxu0 0.0
      %1294 = vmatmul.mubr.f32.gmra.mrb[0].mxu0 %v977
      %v1295 = vpop.f32.mrb[0].mxu0
      %v1296 = vadd.f32 0.0, %v1295
      %v1297 = vpop.f32.mrb[0].mxu0
      %1298 = vmatprep.mubr.f32.mxu0 0.0
      %1299 = vmatmul.mubr.f32.gmra.mrb[0].mxu0 %v978
      %v1300 = vpop.f32.mrb[0].mxu0
      %v1301 = vadd.f32 0.0, %v1300
      %v1302 = vpop.f32.mrb[0].mxu0
      %1303 = vmatprep.mubr.f32.mxu0 0.0
      %1304 = vmatmul.mubr.f32.gmra.mrb[0].mxu0 %v979
      %v1305 = vpop.f32.mrb[0].mxu0
      %v1306 = vadd.f32 0.0, %v1305
      %v1307 = vpop.f32.mrb[0].mxu0
      %1308 = vmatprep.mubr.f32.mxu0 0.0
      %1309 = vmatmul.mubr.f32.gmra.mrb[0].mxu0 %v980
      %v1310 = vpop.f32.mrb[0].mxu0
      %v1311 = vadd.f32 0.0, %v1310
      %v1312 = vpop.f32.mrb[0].mxu0
      %1313 = vmatprep.mubr.f32.mxu0 0.0
      %1314 = vmatmul.mubr.f32.gmra.mrb[0].mxu0 %v981
      %v1315 = vpop.f32.mrb[0].mxu0
      %v1316 = vadd.f32 0.0, %v1315
      %v1317 = vpop.f32.mrb[0].mxu0
      %1318 = vmatprep.mubr.f32.mxu0 0.0
      %1319 = vmatmul.mubr.f32.gmra.mrb[0].mxu0 %v982
      %v1320 = vpop.f32.mrb[0].mxu0
      %v1321 = vadd.f32 0.0, %v1320
      %v1322 = vpop.f32.mrb[0].mxu0
      %1323 = vmatprep.mubr.f32.mxu0 0.0
      %1324 = vmatmul.mubr.f32.gmra.mrb[0].mxu0 %v983
      %v1325 = vpop.f32.mrb[0].mxu0
      %v1326 = vadd.f32 0.0, %v1325
      %v1327 = vpop.f32.mrb[0].mxu0
      %1328 = vmatprep.mubr.f32.mxu0 0.0
      %1329 = vmatmul.mubr.f32.gmra.mrb[0].mxu0 %v984
      %v1330 = vpop.f32.mrb[0].mxu0
      %v1331 = vadd.f32 0.0, %v1330
      %v1332 = vpop.f32.mrb[0].mxu0
      %1333 = vmatprep.mubr.f32.mxu0 0.0
      %1334 = vmatmul.mubr.f32.gmra.mrb[0].mxu0 %v985
      %v1335 = vpop.f32.mrb[0].mxu0
      %v1336 = vadd.f32 0.0, %v1335
      %v1337 = vpop.f32.mrb[0].mxu0
      %1338 = vmatprep.mubr.f32.mxu0 0.0
      %1339 = vmatmul.mubr.f32.gmra.mrb[0].mxu0 %v986
      %v1340 = vpop.f32.mrb[0].mxu0
      %v1341 = vadd.f32 0.0, %v1340
      %v1342 = vpop.f32.mrb[0].mxu0
      %1343 = vmatprep.mubr.f32.mxu0 0.0
      %1344 = vmatmul.mubr.f32.gmra.mrb[0].mxu0 %v987
      %v1345 = vpop.f32.mrb[0].mxu0
      %v1346 = vadd.f32 0.0, %v1345
      %v1347 = vpop.f32.mrb[0].mxu0
      %1348 = vmatprep.mubr.f32.mxu0 0.0
      %1349 = vmatmul.mubr.f32.gmra.mrb[0].mxu0 %v988
      %v1350 = vpop.f32.mrb[0].mxu0
      %v1351 = vadd.f32 0.0, %v1350
      %v1352 = vpop.f32.mrb[0].mxu0
      %1353 = vmatprep.mubr.f32.mxu0 0.0
      %1354 = vmatmul.mubr.f32.gmra.mrb[0].mxu0 %v989
      %v1355 = vpop.f32.mrb[0].mxu0
      %v1356 = vadd.f32 0.0, %v1355
      %v1357 = vpop.f32.mrb[0].mxu0
      %1358 = vmatprep.mubr.f32.mxu0 0.0
      %1359 = vmatmul.mubr.f32.gmra.mrb[0].mxu0 %v990
      %v1360 = vpop.f32.mrb[0].mxu0
      %v1361 = vadd.f32 0.0, %v1360
      %v1362 = vpop.f32.mrb[0].mxu0
      %1363 = vmatprep.mubr.f32.mxu0 0.0
      %1364 = vmatmul.mubr.f32.gmra.mrb[0].mxu0 %v991
      %v1365 = vpop.f32.mrb[0].mxu0
      %v1366 = vadd.f32 0.0, %v1365
      %v1367 = vpop.f32.mrb[0].mxu0
      %1368 = vmatprep.mubr.f32.mxu0 0.0
      %1369 = vmatmul.mubr.f32.gmra.mrb[0].mxu0 %v992
      %v1370 = vpop.f32.mrb[0].mxu0
      %v1371 = vadd.f32 0.0, %v1370
      %v1372 = vpop.f32.mrb[0].mxu0
      %1373 = vmatprep.mubr.f32.mxu0 0.0
      %1374 = vmatmul.mubr.f32.gmra.mrb[0].mxu0 %v993
      %v1375 = vpop.f32.mrb[0].mxu0
      %v1376 = vadd.f32 0.0, %v1375
      %v1377 = vpop.f32.mrb[0].mxu0
      %1378 = vmatprep.mubr.f32.mxu0 0.0
      %1379 = vmatmul.mubr.f32.gmra.mrb[0].mxu0 %v994
      %v1380 = vpop.f32.mrb[0].mxu0
      %v1381 = vadd.f32 0.0, %v1380
      %v1382 = vpop.f32.mrb[0].mxu0
      %1383 = vmatprep.mubr.f32.mxu0 0.0
      %1384 = vmatmul.mubr.f32.gmra.mrb[0].mxu0 %v995
      %v1385 = vpop.f32.mrb[0].mxu0
      %v1386 = vadd.f32 0.0, %v1385
      %v1387 = vpop.f32.mrb[0].mxu0
      %1388 = vmatprep.mubr.f32.mxu0 0.0
      %1389 = vmatmul.mubr.f32.gmra.mrb[0].mxu0 %v996
      %v1390 = vpop.f32.mrb[0].mxu0
      %v1391 = vadd.f32 0.0, %v1390
      %v1392 = vpop.f32.mrb[0].mxu0
      %1393 = vmatprep.mubr.f32.mxu0 0.0
      %1394 = vmatmul.mubr.f32.gmra.mrb[0].mxu0 %v997
      %v1395 = vpop.f32.mrb[0].mxu0
      %v1396 = vadd.f32 0.0, %v1395
      %v1397 = vpop.f32.mrb[0].mxu0
      %1398 = vmatprep.mubr.f32.mxu0 0.0
      %1399 = vmatmul.mubr.f32.gmra.mrb[0].mxu0 %v998
      %v1400 = vpop.f32.mrb[0].mxu0
      %v1401 = vadd.f32 0.0, %v1400
      %v1402 = vpop.f32.mrb[0].mxu0
      %1403 = vmatprep.mubr.f32.mxu0 0.0
      %1404 = vmatmul.mubr.f32.gmra.mrb[0].mxu0 %v999
      %v1405 = vpop.f32.mrb[0].mxu0
      %v1406 = vadd.f32 0.0, %v1405
      %v1407 = vpop.f32.mrb[0].mxu0
      %1408 = vdwg.mxu0
      %vm1409 = vcmask 523264
      %v1411 = vsel %vm1409, %v872, 0
      %v1414 = vsel %vm1409, %v873, 0
      %v1417 = vsel %vm1409, %v874, 0
      %v1420 = vsel %vm1409, %v875, 0
      %v1423 = vsel %vm1409, %v876, 0
      %v1426 = vsel %vm1409, %v877, 0
      %v1429 = vsel %vm1409, %v878, 0
      %v1432 = vsel %vm1409, %v879, 0
      %v1435 = vsel %vm1409, %v880, 0
      %v1438 = vsel %vm1409, %v881, 0
      %v1441 = vsel %vm1409, %v882, 0
      %v1444 = vsel %vm1409, %v883, 0
      %v1447 = vsel %vm1409, %v884, 0
      %v1450 = vsel %vm1409, %v885, 0
      %v1453 = vsel %vm1409, %v886, 0
      %v1456 = vsel %vm1409, %v887, 0
      %v1459 = vsel %vm1409, %v888, 0
      %v1462 = vsel %vm1409, %v889, 0
      %v1465 = vsel %vm1409, %v890, 0
      %v1468 = vsel %vm1409, %v891, 0
      %v1471 = vsel %vm1409, %v892, 0
      %v1474 = vsel %vm1409, %v893, 0
      %v1477 = vsel %vm1409, %v894, 0
      %v1480 = vsel %vm1409, %v895, 0
      %v1483 = vsel %vm1409, %v896, 0
      %v1486 = vsel %vm1409, %v897, 0
      %v1489 = vsel %vm1409, %v898, 0
      %v1492 = vsel %vm1409, %v899, 0
      %v1495 = vsel %vm1409, %v900, 0
      %v1498 = vsel %vm1409, %v901, 0
      %v1501 = vsel %vm1409, %v902, 0
      %v1504 = vsel %vm1409, %v903, 0
      %v1507 = vsel %vm1409, %v904, 0
      %v1510 = vsel %vm1409, %v905, 0
      %v1513 = vsel %vm1409, %v906, 0
      %v1516 = vsel %vm1409, %v907, 0
      %v1519 = vsel %vm1409, %v908, 0
      %v1522 = vsel %vm1409, %v909, 0
      %v1525 = vsel %vm1409, %v910, 0
      %v1528 = vsel %vm1409, %v911, 0
      %v1531 = vsel %vm1409, %v912, 0
      %v1534 = vsel %vm1409, %v913, 0
      %v1537 = vsel %vm1409, %v914, 0
      %v1540 = vsel %vm1409, %v915, 0
      %v1543 = vsel %vm1409, %v916, 0
      %v1546 = vsel %vm1409, %v917, 0
      %v1549 = vsel %vm1409, %v918, 0
      %v1552 = vsel %vm1409, %v919, 0
      %v1555 = vsel %vm1409, %v920, 0
      %v1558 = vsel %vm1409, %v921, 0
      %v1561 = vsel %vm1409, %v922, 0
      %v1564 = vsel %vm1409, %v923, 0
      %v1567 = vsel %vm1409, %v924, 0
      %v1570 = vsel %vm1409, %v925, 0
      %v1573 = vsel %vm1409, %v926, 0
      %v1576 = vsel %vm1409, %v927, 0
      %v1579 = vsel %vm1409, %v928, 0
      %v1582 = vsel %vm1409, %v929, 0
      %v1585 = vsel %vm1409, %v930, 0
      %v1588 = vsel %vm1409, %v931, 0
      %v1591 = vsel %vm1409, %v932, 0
      %v1594 = vsel %vm1409, %v933, 0
      %v1597 = vsel %vm1409, %v934, 0
      %v1600 = vsel %vm1409, %v935, 0
      %1602 = vmatprep.subr.mxu0 0.0
      %1603 = vmatpush1.msra.mxu0 %v1000
      %1604 = vmatprep.subr.mxu0 0.0
      %1605 = vmatpush1.msra.mxu0 %v1001
      %1606 = vmatprep.subr.mxu0 0.0
      %1607 = vmatpush1.msra.mxu0 %v1002
      %1608 = vmatprep.subr.mxu0 0.0
      %1609 = vmatpush1.msra.mxu0 %v1003
      %1610 = vmatprep.subr.mxu0 0.0
      %1611 = vmatpush1.msra.mxu0 %v1004
      %1612 = vmatprep.subr.mxu0 0.0
      %1613 = vmatpush1.msra.mxu0 %v1005
      %1614 = vmatprep.subr.mxu0 0.0
      %1615 = vmatpush1.msra.mxu0 %v1006
      %1616 = vmatprep.subr.mxu0 0.0
      %1617 = vmatpush1.msra.mxu0 %v1007
      %1618 = vmatprep.subr.mxu0 0.0
      %1619 = vmatpush1.msra.mxu0 0.0
      %1620 = vmatprep.subr.mxu0 0.0
      %1621 = vmatpush1.msra.mxu0 0.0
      %1622 = vmatprep.subr.mxu0 0.0
      %1623 = vmatpush1.msra.mxu0 0.0
      %1624 = vmatprep.subr.mxu0 0.0
      %1625 = vmatpush1.msra.mxu0 0.0
      %1626 = vmatprep.subr.mxu0 0.0
      %1627 = vmatpush1.msra.mxu0 0.0
      %1628 = vmatprep.subr.mxu0 0.0
      %1629 = vmatpush1.msra.mxu0 0.0
      %1630 = vmatprep.subr.mxu0 0.0
      %1631 = vmatpush1.msra.mxu0 0.0
      %1632 = vmatprep.subr.mxu0 0.0
      %1633 = vmatpush1.msra.mxu0 0.0
      %1634 = vmatprep.subr.mxu0 0.0
      %1635 = vmatpush1.msra.mxu0 0.0
      %1636 = vmatprep.subr.mxu0 0.0
      %1637 = vmatpush1.msra.mxu0 0.0
      %1638 = vmatprep.subr.mxu0 0.0
      %1639 = vmatpush1.msra.mxu0 0.0
      %1640 = vmatprep.subr.mxu0 0.0
      %1641 = vmatpush1.msra.mxu0 0.0
      %1642 = vmatprep.subr.mxu0 0.0
      %1643 = vmatpush1.msra.mxu0 0.0
      %1644 = vmatprep.subr.mxu0 0.0
      %1645 = vmatpush1.msra.mxu0 0.0
      %1646 = vmatprep.subr.mxu0 0.0
      %1647 = vmatpush1.msra.mxu0 0.0
      %1648 = vmatprep.subr.mxu0 0.0
      %1649 = vmatpush1.msra.mxu0 0.0
      %1650 = vmatprep.subr.mxu0 0.0
      %1651 = vmatpush1.msra.mxu0 0.0
      %1652 = vmatprep.subr.mxu0 0.0
      %1653 = vmatpush1.msra.mxu0 0.0
      %1654 = vmatprep.subr.mxu0 0.0
      %1655 = vmatpush1.msra.mxu0 0.0
      %1656 = vmatprep.subr.mxu0 0.0
      %1657 = vmatpush1.msra.mxu0 0.0
      %1658 = vmatprep.subr.mxu0 0.0
      %1659 = vmatpush1.msra.mxu0 0.0
      %1660 = vmatprep.subr.mxu0 0.0
      %1661 = vmatpush1.msra.mxu0 0.0
      %1662 = vmatprep.subr.mxu0 0.0
      %1663 = vmatpush1.msra.mxu0 0.0
      %1664 = vmatprep.subr.mxu0 0.0
      %1665 = vmatpush1.msra.mxu0 0.0
      %1666 = vmatprep.mubr.f32.mxu0 0.0
      %1667 = vmatmul.mubr.f32.gmra.mrb[0].mxu0 %v1411
      %v1668 = vpop.f32.mrb[0].mxu0
      %v1669 = vadd.f32 %v1091, %v1668
      %v1670 = vpop.f32.mrb[0].mxu0
      %1671 = vmatprep.mubr.f32.mxu0 0.0
      %1672 = vmatmul.mubr.f32.gmra.mrb[0].mxu0 %v1414
      %v1673 = vpop.f32.mrb[0].mxu0
      %v1674 = vadd.f32 %v1096, %v1673
      %v1675 = vpop.f32.mrb[0].mxu0
      %1676 = vmatprep.mubr.f32.mxu0 0.0
      %1677 = vmatmul.mubr.f32.gmra.mrb[0].mxu0 %v1417
      %v1678 = vpop.f32.mrb[0].mxu0
      %v1679 = vadd.f32 %v1101, %v1678
      %v1680 = vpop.f32.mrb[0].mxu0
      %1681 = vmatprep.mubr.f32.mxu0 0.0
      %1682 = vmatmul.mubr.f32.gmra.mrb[0].mxu0 %v1420
      %v1683 = vpop.f32.mrb[0].mxu0
      %v1684 = vadd.f32 %v1106, %v1683
      %v1685 = vpop.f32.mrb[0].mxu0
      %1686 = vmatprep.mubr.f32.mxu0 0.0
      %1687 = vmatmul.mubr.f32.gmra.mrb[0].mxu0 %v1423
      %v1688 = vpop.f32.mrb[0].mxu0
      %v1689 = vadd.f32 %v1111, %v1688
      %v1690 = vpop.f32.mrb[0].mxu0
      %1691 = vmatprep.mubr.f32.mxu0 0.0
      %1692 = vmatmul.mubr.f32.gmra.mrb[0].mxu0 %v1426
      %v1693 = vpop.f32.mrb[0].mxu0
      %v1694 = vadd.f32 %v1116, %v1693
      %v1695 = vpop.f32.mrb[0].mxu0
      %1696 = vmatprep.mubr.f32.mxu0 0.0
      %1697 = vmatmul.mubr.f32.gmra.mrb[0].mxu0 %v1429
      %v1698 = vpop.f32.mrb[0].mxu0
      %v1699 = vadd.f32 %v1121, %v1698
      %v1700 = vpop.f32.mrb[0].mxu0
      %1701 = vmatprep.mubr.f32.mxu0 0.0
      %1702 = vmatmul.mubr.f32.gmra.mrb[0].mxu0 %v1432
      %v1703 = vpop.f32.mrb[0].mxu0
      %v1704 = vadd.f32 %v1126, %v1703
      %v1705 = vpop.f32.mrb[0].mxu0
      %1706 = vmatprep.mubr.f32.mxu0 0.0
      %1707 = vmatmul.mubr.f32.gmra.mrb[0].mxu0 %v1435
      %v1708 = vpop.f32.mrb[0].mxu0
      %v1709 = vadd.f32 %v1131, %v1708
      %v1710 = vpop.f32.mrb[0].mxu0
      %1711 = vmatprep.mubr.f32.mxu0 0.0
      %1712 = vmatmul.mubr.f32.gmra.mrb[0].mxu0 %v1438
      %v1713 = vpop.f32.mrb[0].mxu0
      %v1714 = vadd.f32 %v1136, %v1713
      %v1715 = vpop.f32.mrb[0].mxu0
      %1716 = vmatprep.mubr.f32.mxu0 0.0
      %1717 = vmatmul.mubr.f32.gmra.mrb[0].mxu0 %v1441
      %v1718 = vpop.f32.mrb[0].mxu0
      %v1719 = vadd.f32 %v1141, %v1718
      %v1720 = vpop.f32.mrb[0].mxu0
      %1721 = vmatprep.mubr.f32.mxu0 0.0
      %1722 = vmatmul.mubr.f32.gmra.mrb[0].mxu0 %v1444
      %v1723 = vpop.f32.mrb[0].mxu0
      %v1724 = vadd.f32 %v1146, %v1723
      %v1725 = vpop.f32.mrb[0].mxu0
      %1726 = vmatprep.mubr.f32.mxu0 0.0
      %1727 = vmatmul.mubr.f32.gmra.mrb[0].mxu0 %v1447
      %v1728 = vpop.f32.mrb[0].mxu0
      %v1729 = vadd.f32 %v1151, %v1728
      %v1730 = vpop.f32.mrb[0].mxu0
      %1731 = vmatprep.mubr.f32.mxu0 0.0
      %1732 = vmatmul.mubr.f32.gmra.mrb[0].mxu0 %v1450
      %v1733 = vpop.f32.mrb[0].mxu0
      %v1734 = vadd.f32 %v1156, %v1733
      %v1735 = vpop.f32.mrb[0].mxu0
      %1736 = vmatprep.mubr.f32.mxu0 0.0
      %1737 = vmatmul.mubr.f32.gmra.mrb[0].mxu0 %v1453
      %v1738 = vpop.f32.mrb[0].mxu0
      %v1739 = vadd.f32 %v1161, %v1738
      %v1740 = vpop.f32.mrb[0].mxu0
      %1741 = vmatprep.mubr.f32.mxu0 0.0
      %1742 = vmatmul.mubr.f32.gmra.mrb[0].mxu0 %v1456
      %v1743 = vpop.f32.mrb[0].mxu0
      %v1744 = vadd.f32 %v1166, %v1743
      %v1745 = vpop.f32.mrb[0].mxu0
      %1746 = vmatprep.mubr.f32.mxu0 0.0
      %1747 = vmatmul.mubr.f32.gmra.mrb[0].mxu0 %v1459
      %v1748 = vpop.f32.mrb[0].mxu0
      %v1749 = vadd.f32 %v1171, %v1748
      %v1750 = vpop.f32.mrb[0].mxu0
      %1751 = vmatprep.mubr.f32.mxu0 0.0
      %1752 = vmatmul.mubr.f32.gmra.mrb[0].mxu0 %v1462
      %v1753 = vpop.f32.mrb[0].mxu0
      %v1754 = vadd.f32 %v1176, %v1753
      %v1755 = vpop.f32.mrb[0].mxu0
      %1756 = vmatprep.mubr.f32.mxu0 0.0
      %1757 = vmatmul.mubr.f32.gmra.mrb[0].mxu0 %v1465
      %v1758 = vpop.f32.mrb[0].mxu0
      %v1759 = vadd.f32 %v1181, %v1758
      %v1760 = vpop.f32.mrb[0].mxu0
      %1761 = vmatprep.mubr.f32.mxu0 0.0
      %1762 = vmatmul.mubr.f32.gmra.mrb[0].mxu0 %v1468
      %v1763 = vpop.f32.mrb[0].mxu0
      %v1764 = vadd.f32 %v1186, %v1763
      %v1765 = vpop.f32.mrb[0].mxu0
      %1766 = vmatprep.mubr.f32.mxu0 0.0
      %1767 = vmatmul.mubr.f32.gmra.mrb[0].mxu0 %v1471
      %v1768 = vpop.f32.mrb[0].mxu0
      %v1769 = vadd.f32 %v1191, %v1768
      %v1770 = vpop.f32.mrb[0].mxu0
      %1771 = vmatprep.mubr.f32.mxu0 0.0
      %1772 = vmatmul.mubr.f32.gmra.mrb[0].mxu0 %v1474
      %v1773 = vpop.f32.mrb[0].mxu0
      %v1774 = vadd.f32 %v1196, %v1773
      %v1775 = vpop.f32.mrb[0].mxu0
      %1776 = vmatprep.mubr.f32.mxu0 0.0
      %1777 = vmatmul.mubr.f32.gmra.mrb[0].mxu0 %v1477
      %v1778 = vpop.f32.mrb[0].mxu0
      %v1779 = vadd.f32 %v1201, %v1778
      %v1780 = vpop.f32.mrb[0].mxu0
      %1781 = vmatprep.mubr.f32.mxu0 0.0
      %1782 = vmatmul.mubr.f32.gmra.mrb[0].mxu0 %v1480
      %v1783 = vpop.f32.mrb[0].mxu0
      %v1784 = vadd.f32 %v1206, %v1783
      %v1785 = vpop.f32.mrb[0].mxu0
      %1786 = vmatprep.mubr.f32.mxu0 0.0
      %1787 = vmatmul.mubr.f32.gmra.mrb[0].mxu0 %v1483
      %v1788 = vpop.f32.mrb[0].mxu0
      %v1789 = vadd.f32 %v1211, %v1788
      %v1790 = vpop.f32.mrb[0].mxu0
      %1791 = vmatprep.mubr.f32.mxu0 0.0
      %1792 = vmatmul.mubr.f32.gmra.mrb[0].mxu0 %v1486
      %v1793 = vpop.f32.mrb[0].mxu0
      %v1794 = vadd.f32 %v1216, %v1793
      %v1795 = vpop.f32.mrb[0].mxu0
      %1796 = vmatprep.mubr.f32.mxu0 0.0
      %1797 = vmatmul.mubr.f32.gmra.mrb[0].mxu0 %v1489
      %v1798 = vpop.f32.mrb[0].mxu0
      %v1799 = vadd.f32 %v1221, %v1798
      %v1800 = vpop.f32.mrb[0].mxu0
      %1801 = vmatprep.mubr.f32.mxu0 0.0
      %1802 = vmatmul.mubr.f32.gmra.mrb[0].mxu0 %v1492
      %v1803 = vpop.f32.mrb[0].mxu0
      %v1804 = vadd.f32 %v1226, %v1803
      %v1805 = vpop.f32.mrb[0].mxu0
      %1806 = vmatprep.mubr.f32.mxu0 0.0
      %1807 = vmatmul.mubr.f32.gmra.mrb[0].mxu0 %v1495
      %v1808 = vpop.f32.mrb[0].mxu0
      %v1809 = vadd.f32 %v1231, %v1808
      %v1810 = vpop.f32.mrb[0].mxu0
      %1811 = vmatprep.mubr.f32.mxu0 0.0
      %1812 = vmatmul.mubr.f32.gmra.mrb[0].mxu0 %v1498
      %v1813 = vpop.f32.mrb[0].mxu0
      %v1814 = vadd.f32 %v1236, %v1813
      %v1815 = vpop.f32.mrb[0].mxu0
      %1816 = vmatprep.mubr.f32.mxu0 0.0
      %1817 = vmatmul.mubr.f32.gmra.mrb[0].mxu0 %v1501
      %v1818 = vpop.f32.mrb[0].mxu0
      %v1819 = vadd.f32 %v1241, %v1818
      %v1820 = vpop.f32.mrb[0].mxu0
      %1821 = vmatprep.mubr.f32.mxu0 0.0
      %1822 = vmatmul.mubr.f32.gmra.mrb[0].mxu0 %v1504
      %v1823 = vpop.f32.mrb[0].mxu0
      %v1824 = vadd.f32 %v1246, %v1823
      %v1825 = vpop.f32.mrb[0].mxu0
      %1826 = vmatprep.mubr.f32.mxu0 0.0
      %1827 = vmatmul.mubr.f32.gmra.mrb[0].mxu0 %v1507
      %v1828 = vpop.f32.mrb[0].mxu0
      %v1829 = vadd.f32 %v1251, %v1828
      %v1830 = vpop.f32.mrb[0].mxu0
      %1831 = vmatprep.mubr.f32.mxu0 0.0
      %1832 = vmatmul.mubr.f32.gmra.mrb[0].mxu0 %v1510
      %v1833 = vpop.f32.mrb[0].mxu0
      %v1834 = vadd.f32 %v1256, %v1833
      %v1835 = vpop.f32.mrb[0].mxu0
      %1836 = vmatprep.mubr.f32.mxu0 0.0
      %1837 = vmatmul.mubr.f32.gmra.mrb[0].mxu0 %v1513
      %v1838 = vpop.f32.mrb[0].mxu0
      %v1839 = vadd.f32 %v1261, %v1838
      %v1840 = vpop.f32.mrb[0].mxu0
      %1841 = vmatprep.mubr.f32.mxu0 0.0
      %1842 = vmatmul.mubr.f32.gmra.mrb[0].mxu0 %v1516
      %v1843 = vpop.f32.mrb[0].mxu0
      %v1844 = vadd.f32 %v1266, %v1843
      %v1845 = vpop.f32.mrb[0].mxu0
      %1846 = vmatprep.mubr.f32.mxu0 0.0
      %1847 = vmatmul.mubr.f32.gmra.mrb[0].mxu0 %v1519
      %v1848 = vpop.f32.mrb[0].mxu0
      %v1849 = vadd.f32 %v1271, %v1848
      %v1850 = vpop.f32.mrb[0].mxu0
      %1851 = vmatprep.mubr.f32.mxu0 0.0
      %1852 = vmatmul.mubr.f32.gmra.mrb[0].mxu0 %v1522
      %v1853 = vpop.f32.mrb[0].mxu0
      %v1854 = vadd.f32 %v1276, %v1853
      %v1855 = vpop.f32.mrb[0].mxu0
      %1856 = vmatprep.mubr.f32.mxu0 0.0
      %1857 = vmatmul.mubr.f32.gmra.mrb[0].mxu0 %v1525
      %v1858 = vpop.f32.mrb[0].mxu0
      %v1859 = vadd.f32 %v1281, %v1858
      %v1860 = vpop.f32.mrb[0].mxu0
      %1861 = vmatprep.mubr.f32.mxu0 0.0
      %1862 = vmatmul.mubr.f32.gmra.mrb[0].mxu0 %v1528
      %v1863 = vpop.f32.mrb[0].mxu0
      %v1864 = vadd.f32 %v1286, %v1863
      %v1865 = vpop.f32.mrb[0].mxu0
      %1866 = vmatprep.mubr.f32.mxu0 0.0
      %1867 = vmatmul.mubr.f32.gmra.mrb[0].mxu0 %v1531
      %v1868 = vpop.f32.mrb[0].mxu0
      %v1869 = vadd.f32 %v1291, %v1868
      %v1870 = vpop.f32.mrb[0].mxu0
      %1871 = vmatprep.mubr.f32.mxu0 0.0
      %1872 = vmatmul.mubr.f32.gmra.mrb[0].mxu0 %v1534
      %v1873 = vpop.f32.mrb[0].mxu0
      %v1874 = vadd.f32 %v1296, %v1873
      %v1875 = vpop.f32.mrb[0].mxu0
      %1876 = vmatprep.mubr.f32.mxu0 0.0
      %1877 = vmatmul.mubr.f32.gmra.mrb[0].mxu0 %v1537
      %v1878 = vpop.f32.mrb[0].mxu0
      %v1879 = vadd.f32 %v1301, %v1878
      %v1880 = vpop.f32.mrb[0].mxu0
      %1881 = vmatprep.mubr.f32.mxu0 0.0
      %1882 = vmatmul.mubr.f32.gmra.mrb[0].mxu0 %v1540
      %v1883 = vpop.f32.mrb[0].mxu0
      %v1884 = vadd.f32 %v1306, %v1883
      %v1885 = vpop.f32.mrb[0].mxu0
      %1886 = vmatprep.mubr.f32.mxu0 0.0
      %1887 = vmatmul.mubr.f32.gmra.mrb[0].mxu0 %v1543
      %v1888 = vpop.f32.mrb[0].mxu0
      %v1889 = vadd.f32 %v1311, %v1888
      %v1890 = vpop.f32.mrb[0].mxu0
      %1891 = vmatprep.mubr.f32.mxu0 0.0
      %1892 = vmatmul.mubr.f32.gmra.mrb[0].mxu0 %v1546
      %v1893 = vpop.f32.mrb[0].mxu0
      %v1894 = vadd.f32 %v1316, %v1893
      %v1895 = vpop.f32.mrb[0].mxu0
      %1896 = vmatprep.mubr.f32.mxu0 0.0
      %1897 = vmatmul.mubr.f32.gmra.mrb[0].mxu0 %v1549
      %v1898 = vpop.f32.mrb[0].mxu0
      %v1899 = vadd.f32 %v1321, %v1898
      %v1900 = vpop.f32.mrb[0].mxu0
      %1901 = vmatprep.mubr.f32.mxu0 0.0
      %1902 = vmatmul.mubr.f32.gmra.mrb[0].mxu0 %v1552
      %v1903 = vpop.f32.mrb[0].mxu0
      %v1904 = vadd.f32 %v1326, %v1903
      %v1905 = vpop.f32.mrb[0].mxu0
      %1906 = vmatprep.mubr.f32.mxu0 0.0
      %1907 = vmatmul.mubr.f32.gmra.mrb[0].mxu0 %v1555
      %v1908 = vpop.f32.mrb[0].mxu0
      %v1909 = vadd.f32 %v1331, %v1908
      %v1910 = vpop.f32.mrb[0].mxu0
      %1911 = vmatprep.mubr.f32.mxu0 0.0
      %1912 = vmatmul.mubr.f32.gmra.mrb[0].mxu0 %v1558
      %v1913 = vpop.f32.mrb[0].mxu0
      %v1914 = vadd.f32 %v1336, %v1913
      %v1915 = vpop.f32.mrb[0].mxu0
      %1916 = vmatprep.mubr.f32.mxu0 0.0
      %1917 = vmatmul.mubr.f32.gmra.mrb[0].mxu0 %v1561
      %v1918 = vpop.f32.mrb[0].mxu0
      %v1919 = vadd.f32 %v1341, %v1918
      %v1920 = vpop.f32.mrb[0].mxu0
      %1921 = vmatprep.mubr.f32.mxu0 0.0
      %1922 = vmatmul.mubr.f32.gmra.mrb[0].mxu0 %v1564
      %v1923 = vpop.f32.mrb[0].mxu0
      %v1924 = vadd.f32 %v1346, %v1923
      %v1925 = vpop.f32.mrb[0].mxu0
      %1926 = vmatprep.mubr.f32.mxu0 0.0
      %1927 = vmatmul.mubr.f32.gmra.mrb[0].mxu0 %v1567
      %v1928 = vpop.f32.mrb[0].mxu0
      %v1929 = vadd.f32 %v1351, %v1928
      %v1930 = vpop.f32.mrb[0].mxu0
      %1931 = vmatprep.mubr.f32.mxu0 0.0
      %1932 = vmatmul.mubr.f32.gmra.mrb[0].mxu0 %v1570
      %v1933 = vpop.f32.mrb[0].mxu0
      %v1934 = vadd.f32 %v1356, %v1933
      %v1935 = vpop.f32.mrb[0].mxu0
      %1936 = vmatprep.mubr.f32.mxu0 0.0
      %1937 = vmatmul.mubr.f32.gmra.mrb[0].mxu0 %v1573
      %v1938 = vpop.f32.mrb[0].mxu0
      %v1939 = vadd.f32 %v1361, %v1938
      %v1940 = vpop.f32.mrb[0].mxu0
      %1941 = vmatprep.mubr.f32.mxu0 0.0
      %1942 = vmatmul.mubr.f32.gmra.mrb[0].mxu0 %v1576
      %v1943 = vpop.f32.mrb[0].mxu0
      %v1944 = vadd.f32 %v1366, %v1943
      %v1945 = vpop.f32.mrb[0].mxu0
      %1946 = vmatprep.mubr.f32.mxu0 0.0
      %1947 = vmatmul.mubr.f32.gmra.mrb[0].mxu0 %v1579
      %v1948 = vpop.f32.mrb[0].mxu0
      %v1949 = vadd.f32 %v1371, %v1948
      %v1950 = vpop.f32.mrb[0].mxu0
      %1951 = vmatprep.mubr.f32.mxu0 0.0
      %1952 = vmatmul.mubr.f32.gmra.mrb[0].mxu0 %v1582
      %v1953 = vpop.f32.mrb[0].mxu0
      %v1954 = vadd.f32 %v1376, %v1953
      %v1955 = vpop.f32.mrb[0].mxu0
      %1956 = vmatprep.mubr.f32.mxu0 0.0
      %1957 = vmatmul.mubr.f32.gmra.mrb[0].mxu0 %v1585
      %v1958 = vpop.f32.mrb[0].mxu0
      %v1959 = vadd.f32 %v1381, %v1958
      %v1960 = vpop.f32.mrb[0].mxu0
      %1961 = vmatprep.mubr.f32.mxu0 0.0
      %1962 = vmatmul.mubr.f32.gmra.mrb[0].mxu0 %v1588
      %v1963 = vpop.f32.mrb[0].mxu0
      %v1964 = vadd.f32 %v1386, %v1963
      %v1965 = vpop.f32.mrb[0].mxu0
      %1966 = vmatprep.mubr.f32.mxu0 0.0
      %1967 = vmatmul.mubr.f32.gmra.mrb[0].mxu0 %v1591
      %v1968 = vpop.f32.mrb[0].mxu0
      %v1969 = vadd.f32 %v1391, %v1968
      %v1970 = vpop.f32.mrb[0].mxu0
      %1971 = vmatprep.mubr.f32.mxu0 0.0
      %1972 = vmatmul.mubr.f32.gmra.mrb[0].mxu0 %v1594
      %v1973 = vpop.f32.mrb[0].mxu0
      %v1974 = vadd.f32 %v1396, %v1973
      %v1975 = vpop.f32.mrb[0].mxu0
      %1976 = vmatprep.mubr.f32.mxu0 0.0
      %1977 = vmatmul.mubr.f32.gmra.mrb[0].mxu0 %v1597
      %v1978 = vpop.f32.mrb[0].mxu0
      %v1979 = vadd.f32 %v1401, %v1978
      %v1980 = vpop.f32.mrb[0].mxu0
      %1981 = vmatprep.mubr.f32.mxu0 0.0
      %1982 = vmatmul.mubr.f32.gmra.mrb[0].mxu0 %v1600
      %v1983 = vpop.f32.mrb[0].mxu0
      %v1984 = vadd.f32 %v1406, %v1983
      %v1985 = vpop.f32.mrb[0].mxu0
      %1986 = vdwg.mxu0
      %v1987 = vld [vmem:[%s5] sm:$0x1]
      %v1989 = vlaneseq
      %v1990 = vshrl.u32 %v1989, 7
      %v1991 = vsub.s32 0, %v1990
      %v1992 = vrot.slane %v1987, %v1991
      %v1994 = vadd.f32 %v1669, %v1992
      %v1995 = vadd.f32 %v1674, %v1992
      %v1996 = vadd.f32 %v1679, %v1992
      %v1997 = vadd.f32 %v1684, %v1992
      %v1998 = vadd.f32 %v1689, %v1992
      %v1999 = vadd.f32 %v1694, %v1992
      %v2000 = vadd.f32 %v1699, %v1992
      %v2001 = vadd.f32 %v1704, %v1992
      %v2002 = vadd.f32 %v1709, %v1992
      %v2003 = vadd.f32 %v1714, %v1992
      %v2004 = vadd.f32 %v1719, %v1992
      %v2005 = vadd.f32 %v1724, %v1992
      %v2006 = vadd.f32 %v1729, %v1992
      %v2007 = vadd.f32 %v1734, %v1992
      %v2008 = vadd.f32 %v1739, %v1992
      %v2009 = vadd.f32 %v1744, %v1992
      %v2010 = vadd.f32 %v1749, %v1992
      %v2011 = vadd.f32 %v1754, %v1992
      %v2012 = vadd.f32 %v1759, %v1992
      %v2013 = vadd.f32 %v1764, %v1992
      %v2014 = vadd.f32 %v1769, %v1992
      %v2015 = vadd.f32 %v1774, %v1992
      %v2016 = vadd.f32 %v1779, %v1992
      %v2017 = vadd.f32 %v1784, %v1992
      %v2018 = vadd.f32 %v1789, %v1992
      %v2019 = vadd.f32 %v1794, %v1992
      %v2020 = vadd.f32 %v1799, %v1992
      %v2021 = vadd.f32 %v1804, %v1992
      %v2022 = vadd.f32 %v1809, %v1992
      %v2023 = vadd.f32 %v1814, %v1992
      %v2024 = vadd.f32 %v1819, %v1992
      %v2025 = vadd.f32 %v1824, %v1992
      %v2026 = vadd.f32 %v1829, %v1992
      %v2027 = vadd.f32 %v1834, %v1992
      %v2028 = vadd.f32 %v1839, %v1992
      %v2029 = vadd.f32 %v1844, %v1992
      %v2030 = vadd.f32 %v1849, %v1992
      %v2031 = vadd.f32 %v1854, %v1992
      %v2032 = vadd.f32 %v1859, %v1992
      %v2033 = vadd.f32 %v1864, %v1992
      %v2034 = vadd.f32 %v1869, %v1992
      %v2035 = vadd.f32 %v1874, %v1992
      %v2036 = vadd.f32 %v1879, %v1992
      %v2037 = vadd.f32 %v1884, %v1992
      %v2038 = vadd.f32 %v1889, %v1992
      %v2039 = vadd.f32 %v1894, %v1992
      %v2040 = vadd.f32 %v1899, %v1992
      %v2041 = vadd.f32 %v1904, %v1992
      %v2042 = vadd.f32 %v1909, %v1992
      %v2043 = vadd.f32 %v1914, %v1992
      %v2044 = vadd.f32 %v1919, %v1992
      %v2045 = vadd.f32 %v1924, %v1992
      %v2046 = vadd.f32 %v1929, %v1992
      %v2047 = vadd.f32 %v1934, %v1992
      %v2048 = vadd.f32 %v1939, %v1992
      %v2049 = vadd.f32 %v1944, %v1992
      %v2050 = vadd.f32 %v1949, %v1992
      %v2051 = vadd.f32 %v1954, %v1992
      %v2052 = vadd.f32 %v1959, %v1992
      %v2053 = vadd.f32 %v1964, %v1992
      %v2054 = vadd.f32 %v1969, %v1992
      %v2055 = vadd.f32 %v1974, %v1992
      %v2056 = vadd.f32 %v1979, %v1992
      %v2057 = vadd.f32 %v1984, %v1992
      %2058 = vst [vmem:[%s253] sm:$0xff] %v1994
      %2059 = vst [vmem:[%s253 + $0x8] sm:$0xff] %v1995
      %2060 = vst [vmem:[%s253 + $0x10] sm:$0xff] %v1996
      %2061 = vst [vmem:[%s253 + $0x18] sm:$0xff] %v1997
      %2062 = vst [vmem:[%s253 + $0x20] sm:$0xff] %v1998
      %2063 = vst [vmem:[%s253 + $0x28] sm:$0xff] %v1999
      %2064 = vst [vmem:[%s253 + $0x30] sm:$0xff] %v2000
      %2065 = vst [vmem:[%s253 + $0x38] sm:$0xff] %v2001
      %2066 = vst [vmem:[%s253 + $0x40] sm:$0xff] %v2002
      %2067 = vst [vmem:[%s253 + $0x48] sm:$0xff] %v2003
      %2068 = vst [vmem:[%s253 + $0x50] sm:$0xff] %v2004
      %2069 = vst [vmem:[%s253 + $0x58] sm:$0xff] %v2005
      %2070 = vst [vmem:[%s253 + $0x60] sm:$0xff] %v2006
      %2071 = vst [vmem:[%s253 + $0x68] sm:$0xff] %v2007
      %2072 = vst [vmem:[%s253 + $0x70] sm:$0xff] %v2008
      %2073 = vst [vmem:[%s253 + $0x78] sm:$0xff] %v2009
      %2074 = vst [vmem:[%s253 + $0x80] sm:$0xff] %v2010
      %2075 = vst [vmem:[%s253 + $0x88] sm:$0xff] %v2011
      %2076 = vst [vmem:[%s253 + $0x90] sm:$0xff] %v2012
      %2077 = vst [vmem:[%s253 + $0x98] sm:$0xff] %v2013
      %2078 = vst [vmem:[%s253 + $0xa0] sm:$0xff] %v2014
      %2079 = vst [vmem:[%s253 + $0xa8] sm:$0xff] %v2015
      %2080 = vst [vmem:[%s253 + $0xb0] sm:$0xff] %v2016
      %2081 = vst [vmem:[%s253 + $0xb8] sm:$0xff] %v2017
      %2082 = vst [vmem:[%s253 + $0xc0] sm:$0xff] %v2018
      %2083 = vst [vmem:[%s253 + $0xc8] sm:$0xff] %v2019
      %2084 = vst [vmem:[%s253 + $0xd0] sm:$0xff] %v2020
      %2085 = vst [vmem:[%s253 + $0xd8] sm:$0xff] %v2021
      %2086 = vst [vmem:[%s253 + $0xe0] sm:$0xff] %v2022
      %2087 = vst [vmem:[%s253 + $0xe8] sm:$0xff] %v2023
      %2088 = vst [vmem:[%s253 + $0xf0] sm:$0xff] %v2024
      %2089 = vst [vmem:[%s253 + $0xf8] sm:$0xff] %v2025
      %2090 = vst [vmem:[%s253 + $0x100] sm:$0xff] %v2026
      %2091 = vst [vmem:[%s253 + $0x108] sm:$0xff] %v2027
      %2092 = vst [vmem:[%s253 + $0x110] sm:$0xff] %v2028
      %2093 = vst [vmem:[%s253 + $0x118] sm:$0xff] %v2029
      %2094 = vst [vmem:[%s253 + $0x120] sm:$0xff] %v2030
      %2095 = vst [vmem:[%s253 + $0x128] sm:$0xff] %v2031
      %2096 = vst [vmem:[%s253 + $0x130] sm:$0xff] %v2032
      %2097 = vst [vmem:[%s253 + $0x138] sm:$0xff] %v2033
      %2098 = vst [vmem:[%s253 + $0x140] sm:$0xff] %v2034
      %2099 = vst [vmem:[%s253 + $0x148] sm:$0xff] %v2035
      %2100 = vst [vmem:[%s253 + $0x150] sm:$0xff] %v2036
      %2101 = vst [vmem:[%s253 + $0x158] sm:$0xff] %v2037
      %2102 = vst [vmem:[%s253 + $0x160] sm:$0xff] %v2038
      %2103 = vst [vmem:[%s253 + $0x168] sm:$0xff] %v2039
      %2104 = vst [vmem:[%s253 + $0x170] sm:$0xff] %v2040
      %2105 = vst [vmem:[%s253 + $0x178] sm:$0xff] %v2041
      %2106 = vst [vmem:[%s253 + $0x180] sm:$0xff] %v2042
      %2107 = vst [vmem:[%s253 + $0x188] sm:$0xff] %v2043
      %2108 = vst [vmem:[%s253 + $0x190] sm:$0xff] %v2044
      %2109 = vst [vmem:[%s253 + $0x198] sm:$0xff] %v2045
      %2110 = vst [vmem:[%s253 + $0x1a0] sm:$0xff] %v2046
      %2111 = vst [vmem:[%s253 + $0x1a8] sm:$0xff] %v2047
      %2112 = vst [vmem:[%s253 + $0x1b0] sm:$0xff] %v2048
      %2113 = vst [vmem:[%s253 + $0x1b8] sm:$0xff] %v2049
      %2114 = vst [vmem:[%s253 + $0x1c0] sm:$0xff] %v2050
      %2115 = vst [vmem:[%s253 + $0x1c8] sm:$0xff] %v2051
      %2116 = vst [vmem:[%s253 + $0x1d0] sm:$0xff] %v2052
      %2117 = vst [vmem:[%s253 + $0x1d8] sm:$0xff] %v2053
      %2118 = vst [vmem:[%s253 + $0x1e0] sm:$0xff] %v2054
      %2119 = vst [vmem:[%s253 + $0x1e8] sm:$0xff] %v2055
      %2120 = vst [vmem:[%s253 + $0x1f0] sm:$0xff] %v2056
      %2121 = vst [vmem:[%s253 + $0x1f8] sm:$0xff] %v2057
      %s2122 = smul.u32 64, %s17
      %p2123 = scmp.lt.s32.totalorder %s2122, 127
      %s2124 = scalar_select %p2123, %s2122, 127
      %s2125 = smul.addr %s2124, 8
      %s2126 = scalar_lea.vmem %s6, %s2125
      // Predicated region
      $region45: #{_lambda_.1} parent=43 // pred_check
        %p2127 = pneg %p166
      $region46: #{_lambda_.1} parent=43 // pred_check_branch
        %2129 = sbr.rel (%p2127) target = $region48
      $region47: #{_lambda_.1} parent=43 // pred_region
        %s2130 = smul.u32 64, %s17
      $region48: #{_lambda_.1} parent=43 // pred_fallthru
        _
    $region44: #{_lambda_.1} parent=5 // pred_fallthru
      _
    %p2131 = scmp.le.s32.totalorder 2, %s12
    // Predicated region
    $region49: #{_lambda_.1} parent=5 // pred_check
      %p2132 = pneg %p2131
    $region50: #{_lambda_.1} parent=5 // pred_check_branch
      %2134 = sbr.rel (%p2132) target = $region52
    $region51: #{_lambda_.1} parent=5 // pred_region
      %s2135 = ssub.s32 %s12, 2
      // Predicated region
      $region53: #{_lambda_.1} parent=51 // pred_check
        %p2136 = pneg %p172
      $region54: #{_lambda_.1} parent=51 // pred_check_branch
        %2138 = sbr.rel (%p2136) target = $region56
      $region55: #{_lambda_.1} parent=51 // pred_region
        %s2139 = smul.u32 64, %s18
        %p2140 = scmp.lt.s32.totalorder %s2139, 127
        %s2141 = scalar_select %p2140, %s2139, 127
        %s2142 = smul.addr %s2141, 8
        %s2143 = scalar_lea.vmem %s6, %s2142
      $region56: #{_lambda_.1} parent=51 // pred_fallthru
        _
    $region52: #{_lambda_.1} parent=5 // pred_fallthru
      _
  $region6: #{_lambda_.1} parent=0 // loop_footer
    %s16 = sadd.s32 1, %s12
  $region7: #{_lambda_.1} parent=0 // loop_footer_branch
    %11 = sbr.rel target = $region3
  $region8: #{_lambda_.1} parent=0 // loop_exit
    _

</llo_original>
